<compile_context>
chip_gen: v7x
topology: tpu7x:2x2x1
jax: 0.10.0
libtpu: 0.0.40
codegen_flags: <defaults>
</compile_context>

<pallas_src>
import functools
import math

import jax
import jax.numpy as jnp
from jax import lax
from jax.experimental import pallas as pl
from jax.experimental.pallas import tpu as pltpu


# ------------------------------ Pallas kernel ------------------------------

def transformer_block_kernel(x_ref, slab_ref, wqkv_ref, wo_ref, w1_ref, w2_ref,
                             out_ref, qs_ref, ks_ref, vs_ref,
                             *, num_heads, seq_len):
    x = x_ref[...].astype(jnp.float32)            # (R, D)  with R = nb * T
    R, D = x.shape
    T = seq_len
    nb = R // T                                   # batches in this block
    H = num_heads
    hd = D // H

    # Packed parameter slab: one (8, >=128) lane-dense tile.
    slab = slab_ref[...]
    ln1_s, ln1_b = slab[0:1, :D], slab[1:2, :D]
    b_qkv = slab[2:3, :3 * D]
    bo = slab[3:4, :D]
    ln2_s, ln2_b = slab[4:5, :D], slab[5:6, :D]
    b1 = slab[6:7, :4 * D]
    b2 = slab[7:8, :D]

    def layernorm(z, scale, shift):
        mean = jnp.mean(z, axis=-1, keepdims=True)
        var = jnp.mean(jnp.square(z - mean), axis=-1, keepdims=True)  # unbiased=False
        return (z - mean) * lax.rsqrt(var + 1e-5) * scale + shift

    # ---- LayerNorm 1 + fused QKV projection (one MXU call) ----
    h1 = layernorm(x, ln1_s, ln1_b)
    qkv = jnp.dot(h1, wqkv_ref[...], preferred_element_type=jnp.float32) + b_qkv
    q = qkv[:, 0 * D:1 * D] * jnp.float32(1.0 / math.sqrt(hd))  # fold 1/sqrt(hd)
    k = qkv[:, 1 * D:2 * D]
    v = qkv[:, 2 * D:3 * D]

    # ---- pack heads into the leading batch axis: (H*nb, T, hd) ----
    # Static row-block stores into VMEM scratch only (lane slice + leading-dim
    # reshape); no lane-changing reshapes or transposes.
    for h in range(H):
        sl = slice(h * hd, (h + 1) * hd)
        qs_ref[h * nb:(h + 1) * nb] = q[:, sl].reshape(nb, T, hd)
        ks_ref[h * nb:(h + 1) * nb] = k[:, sl].reshape(nb, T, hd)
        vs_ref[h * nb:(h + 1) * nb] = v[:, sl].reshape(nb, T, hd)
    qs, ks, vs = qs_ref[...], ks_ref[...], vs_ref[...]

    # ---- causal attention: ONE batched scores einsum + ONE context einsum ----
    rows = lax.broadcasted_iota(jnp.int32, (T, T), 0)
    cols = lax.broadcasted_iota(jnp.int32, (T, T), 1)
    # Hoisted additive causal mask (finite value; diagonal keeps >=1 valid entry
    # per row, so softmax is NaN-safe).
    mask_add = jnp.where(cols <= rows, 0.0, -1e30).astype(jnp.float32)[None]

    scores = jnp.einsum("btd,bsd->bts", qs, ks,
                        preferred_element_type=jnp.float32) + mask_add
    m = jnp.max(scores, axis=-1, keepdims=True)
    e = jnp.exp(scores - m)
    w = e * pl.reciprocal(jnp.sum(e, axis=-1, keepdims=True), approx=True)
    ctx = jnp.einsum("bts,bsd->btd", w, vs,
                     preferred_element_type=jnp.float32)      # (H*nb, T, hd)

    # concat(ctx_h) @ Wo  ==  sum_h ctx_h @ Wo[h*hd:(h+1)*hd, :]  (no lane concat)
    wo = wo_ref[...]
    attn = jnp.dot(ctx[0:nb].reshape(R, hd), wo[0:hd, :],
                   preferred_element_type=jnp.float32)
    for h in range(1, H):
        attn = attn + jnp.dot(ctx[h * nb:(h + 1) * nb].reshape(R, hd),
                              wo[h * hd:(h + 1) * hd, :],
                              preferred_element_type=jnp.float32)

    # attention dropout / shortcut dropout with p=0.0 are identity
    x1 = x + attn + bo

    # ---- LayerNorm 2 + FeedForward (GELU tanh) ----
    h2 = layernorm(x1, ln2_s, ln2_b)
    f = jnp.dot(h2, w1_ref[...], preferred_element_type=jnp.float32) + b1
    c = jnp.float32(0.7978845608028654)           # sqrt(2/pi)
    f = 0.5 * f * (1.0 + jnp.tanh(c * (f + 0.044715 * f * f * f)))
    f = jnp.dot(f, w2_ref[...], preferred_element_type=jnp.float32) + b2

    out_ref[...] = (x1 + f).astype(out_ref.dtype)


# --------------------------------- wrapper ---------------------------------

def prepare_params(params):
    """One-time packing of weights (kept OUT of the per-call forward path)."""
    D = params["wq"].shape[0]
    wqkv = jnp.concatenate([params["wq"], params["wk"], params["wv"]], axis=1)
    W = max(128, ((4 * D + 127) // 128) * 128)

    def row(v):
        v = jnp.asarray(v, jnp.float32).reshape(-1)
        return jnp.pad(v, (0, W - v.shape[0]))

    slab = jnp.stack([
        row(params["ln1_s"]), row(params["ln1_b"]),
        row(jnp.concatenate([params["bq"], params["bk"], params["bv"]])),
        row(params["bo"]),
        row(params["ln2_s"]), row(params["ln2_b"]),
        row(params["b1"]), row(params["b2"]),
    ])                                            # (8, W) lane-dense slab

    return {"slab": slab, "wqkv": wqkv, "wo": params["wo"],
            "w1": params["w1"], "w2": params["w2"]}


def transformer_block(x, prep, num_heads):
    B, T, D = x.shape
    dt = x.dtype
    R = B * T
    hd = D // num_heads
    slab, wqkv = prep["slab"], prep["wqkv"]
    wo, w1, w2 = prep["wo"], prep["w1"], prep["w2"]

    x2 = x.reshape(R, D)

    flops = 2 * B * T * D * (12 * D + 2 * T)
    transcendentals = B * num_heads * T * (T + 1) + B * T * (4 * D + 2)
    bytes_accessed = 4 * (2 * R * D + slab.size + wqkv.size
                          + wo.size + w1.size + w2.size)

    kernel = functools.partial(transformer_block_kernel,
                               num_heads=num_heads, seq_len=T)

    out2 = pl.pallas_call(
        kernel,
        out_shape=jax.ShapeDtypeStruct((R, D), dt),
        grid=(1,),                                # whole problem in one VMEM block
        in_specs=[
            pl.BlockSpec((R, D), lambda i: (0, 0)),
            pl.BlockSpec(slab.shape, lambda i: (0, 0)),
            pl.BlockSpec(wqkv.shape, lambda i: (0, 0)),
            pl.BlockSpec(wo.shape, lambda i: (0, 0)),
            pl.BlockSpec(w1.shape, lambda i: (0, 0)),
            pl.BlockSpec(w2.shape, lambda i: (0, 0)),
        ],
        out_specs=pl.BlockSpec((R, D), lambda i: (0, 0)),
        scratch_shapes=[
            pltpu.VMEM((num_heads * B, T, hd), jnp.float32),
            pltpu.VMEM((num_heads * B, T, hd), jnp.float32),
            pltpu.VMEM((num_heads * B, T, hd), jnp.float32),
        ],
        compiler_params=pltpu.CompilerParams(
            dimension_semantics=("arbitrary",)),
        cost_estimate=pl.CostEstimate(
            flops=flops, transcendentals=transcendentals,
            bytes_accessed=bytes_accessed),
    )(x2, slab, wqkv, wo, w1, w2)

    return out2.reshape(B, T, D)


# --------------------------- pure-JAX reference ----------------------------

def reference_block(x, p, num_heads):
    def ln(z, s, b):
        mean = z.mean(-1, keepdims=True)
        var = ((z - mean) ** 2).mean(-1, keepdims=True)
        return s * (z - mean) / jnp.sqrt(var + 1e-5) + b

    B, T, D = x.shape
    hd = D // num_heads

    h = ln(x, p["ln1_s"], p["ln1_b"])
    q = h @ p["wq"] + p["bq"]
    k = h @ p["wk"] + p["bk"]
    v = h @ p["wv"] + p["bv"]
    q = q.reshape(B, T, num_heads, hd).transpose(0, 2, 1, 3)
    k = k.reshape(B, T, num_heads, hd).transpose(0, 2, 1, 3)
    v = v.reshape(B, T, num_heads, hd).transpose(0, 2, 1, 3)
    scores = jnp.einsum("bhtd,bhsd->bhts", q, k) / jnp.sqrt(jnp.float32(hd))
    causal = jnp.tril(jnp.ones((T, T), bool))
    scores = jnp.where(causal, scores, -jnp.inf)
    w = jax.nn.softmax(scores, axis=-1)
    ctx = jnp.einsum("bhts,bhsd->bhtd", w, v).transpose(0, 2, 1, 3).reshape(B, T, D)
    attn_out = ctx @ p["wo"] + p["bo"]
    x1 = x + attn_out

    h2 = ln(x1, p["ln2_s"], p["ln2_b"])
    f = h2 @ p["w1"] + p["b1"]
    f = 0.5 * f * (1.0 + jnp.tanh(jnp.sqrt(2.0 / jnp.pi) * (f + 0.044715 * f ** 3)))
    f = f @ p["w2"] + p["b2"]
    return x1 + f


# ----------------------------------- main -----------------------------------

if __name__ == "__main__":
    # cfg: emb_dim=32, context_length=8, n_heads=4, drop_rate=0.0, qkv_bias=True
    B, T, D, H = 2, 8, 32, 4
    hidden = 4 * D

    key = jax.random.PRNGKey(0)
    keys = jax.random.split(key, 13)
    init = lambda k, shape, s=0.02: (s * jax.random.normal(k, shape)).astype(jnp.float32)

    params = {
        "ln1_s": jnp.ones((D,), jnp.float32),
        "ln1_b": jnp.zeros((D,), jnp.float32),
        "wq": init(keys[0], (D, D)), "bq": init(keys[1], (D,)),
        "wk": init(keys[2], (D, D)), "bk": init(keys[3], (D,)),
        "wv": init(keys[4], (D, D)), "bv": init(keys[5], (D,)),
        "wo": init(keys[6], (D, D)), "bo": init(keys[7], (D,)),
        "ln2_s": jnp.ones((D,), jnp.float32),
        "ln2_b": jnp.zeros((D,), jnp.float32),
        "w1": init(keys[8], (D, hidden)), "b1": init(keys[9], (hidden,)),
        "w2": init(keys[10], (hidden, D)), "b2": init(keys[11], (D,)),
    }

    x = jax.random.uniform(keys[12], (B, T, D), dtype=jnp.float32)

    prep = prepare_params(params)                 # one-time packing (not per call)
    out = jax.block_until_ready(transformer_block(x, prep, num_heads=H))
    ref = reference_block(x, params, num_heads=H)

    assert out.shape == (B, T, D)
    # tolerance loosened slightly vs f32 reference because the softmax
    # denominator uses the approximate EUP reciprocal (pl.reciprocal approx=True)
    assert jnp.allclose(out, ref, atol=1e-3, rtol=1e-3), "mismatch vs reference"

    print("KERNEL_OK")
</pallas_src>

<mosaic_0001>
module attributes {stable_mosaic.version = 11 : i64} {
  func.func @transformer_block_kernel(%arg0: i32, %arg1: memref<16x32xf32, #tpu.memory_space<vmem>>, %arg2: memref<8x128xf32, #tpu.memory_space<vmem>>, %arg3: memref<32x96xf32, #tpu.memory_space<vmem>>, %arg4: memref<32x32xf32, #tpu.memory_space<vmem>>, %arg5: memref<32x128xf32, #tpu.memory_space<vmem>>, %arg6: memref<128x32xf32, #tpu.memory_space<vmem>>, %arg7: memref<16x32xf32, #tpu.memory_space<vmem>>, %arg8: memref<8x8x8xf32, #tpu.memory_space<vmem>>, %arg9: memref<8x8x8xf32, #tpu.memory_space<vmem>>, %arg10: memref<8x8x8xf32, #tpu.memory_space<vmem>>) attributes {dimension_semantics = [#tpu.dimension_semantics<arbitrary>], iteration_bounds = array<i64: 1>, scalar_prefetch = 0 : i64, scratch_operands = 3 : i64, tpu.core_type = #tpu.core_type<tc>, window_params = [{pipeline_mode = #tpu.pipeline_mode<synchronous>, transform_indices = @transform_0, window_bounds = array<i64: 16, 32>}, {pipeline_mode = #tpu.pipeline_mode<synchronous>, transform_indices = @transform_1, window_bounds = array<i64: 8, 128>}, {pipeline_mode = #tpu.pipeline_mode<synchronous>, transform_indices = @transform_2, window_bounds = array<i64: 32, 96>}, {pipeline_mode = #tpu.pipeline_mode<synchronous>, transform_indices = @transform_3, window_bounds = array<i64: 32, 32>}, {pipeline_mode = #tpu.pipeline_mode<synchronous>, transform_indices = @transform_4, window_bounds = array<i64: 32, 128>}, {pipeline_mode = #tpu.pipeline_mode<synchronous>, transform_indices = @transform_5, window_bounds = array<i64: 128, 32>}, {pipeline_mode = #tpu.pipeline_mode<synchronous>, transform_indices = @transform_6, window_bounds = array<i64: 16, 32>}]} {
    %c0 = arith.constant 0 : index
    %c0_0 = arith.constant 0 : index
    %0 = vector.load %arg1[%c0, %c0_0] : memref<16x32xf32, #tpu.memory_space<vmem>>, vector<16x32xf32>
    %c0_1 = arith.constant 0 : index
    %c0_2 = arith.constant 0 : index
    %1 = vector.load %arg2[%c0_1, %c0_2] : memref<8x128xf32, #tpu.memory_space<vmem>>, vector<8x128xf32>
    %2 = vector.extract_strided_slice %1 {offsets = [0, 0], sizes = [1, 32], strides = [1, 1]} : vector<8x128xf32> to vector<1x32xf32>
    %3 = vector.extract_strided_slice %1 {offsets = [1, 0], sizes = [1, 32], strides = [1, 1]} : vector<8x128xf32> to vector<1x32xf32>
    %4 = vector.extract_strided_slice %1 {offsets = [2, 0], sizes = [1, 96], strides = [1, 1]} : vector<8x128xf32> to vector<1x96xf32>
    %5 = vector.extract_strided_slice %1 {offsets = [3, 0], sizes = [1, 32], strides = [1, 1]} : vector<8x128xf32> to vector<1x32xf32>
    %6 = vector.extract_strided_slice %1 {offsets = [4, 0], sizes = [1, 32], strides = [1, 1]} : vector<8x128xf32> to vector<1x32xf32>
    %7 = vector.extract_strided_slice %1 {offsets = [5, 0], sizes = [1, 32], strides = [1, 1]} : vector<8x128xf32> to vector<1x32xf32>
    %8 = vector.extract_strided_slice %1 {offsets = [6, 0], sizes = [1, 128], strides = [1, 1]} : vector<8x128xf32> to vector<1x128xf32>
    %9 = vector.extract_strided_slice %1 {offsets = [7, 0], sizes = [1, 32], strides = [1, 1]} : vector<8x128xf32> to vector<1x32xf32>
    %cst = arith.constant dense<0.000000e+00> : vector<16xf32>
    %10 = vector.multi_reduction <add>, %0, %cst [1] : vector<16x32xf32> to vector<16xf32>
    %11 = vector.shape_cast %10 : vector<16xf32> to vector<16x1xf32>
    %cst_3 = arith.constant 3.200000e+01 : f32
    %12 = vector.broadcast %cst_3 : f32 to vector<16x1xf32>
    %13 = arith.divf %11, %12 : vector<16x1xf32>
    %14 = vector.broadcast %13 : vector<16x1xf32> to vector<16x32xf32>
    %15 = arith.subf %0, %14 : vector<16x32xf32>
    %16 = arith.mulf %15, %15 : vector<16x32xf32>
    %cst_4 = arith.constant dense<0.000000e+00> : vector<16xf32>
    %17 = vector.multi_reduction <add>, %16, %cst_4 [1] : vector<16x32xf32> to vector<16xf32>
    %18 = vector.shape_cast %17 : vector<16xf32> to vector<16x1xf32>
    %cst_5 = arith.constant 3.200000e+01 : f32
    %19 = vector.broadcast %cst_5 : f32 to vector<16x1xf32>
    %20 = arith.divf %18, %19 : vector<16x1xf32>
    %21 = vector.broadcast %13 : vector<16x1xf32> to vector<16x32xf32>
    %22 = arith.subf %0, %21 : vector<16x32xf32>
    %cst_6 = arith.constant 9.99999974E-6 : f32
    %23 = vector.broadcast %cst_6 : f32 to vector<16x1xf32>
    %24 = arith.addf %20, %23 : vector<16x1xf32>
    %25 = math.rsqrt %24 : vector<16x1xf32>
    %26 = vector.broadcast %25 : vector<16x1xf32> to vector<16x32xf32>
    %27 = arith.mulf %22, %26 : vector<16x32xf32>
    %28 = vector.broadcast %2 : vector<1x32xf32> to vector<16x32xf32>
    %29 = arith.mulf %27, %28 : vector<16x32xf32>
    %30 = vector.broadcast %3 : vector<1x32xf32> to vector<16x32xf32>
    %31 = arith.addf %29, %30 : vector<16x32xf32>
    %c0_7 = arith.constant 0 : index
    %c0_8 = arith.constant 0 : index
    %32 = vector.load %arg3[%c0_7, %c0_8] : memref<32x96xf32, #tpu.memory_space<vmem>>, vector<32x96xf32>
    %cst_9 = arith.constant dense<0.000000e+00> : vector<16x96xf32>
    %33 = tpu.matmul %31, %32, %cst_9 {dimension_numbers = #tpu.dot_dimension_numbers<[1], [0], [0], [1], [0, 0, 1, 1], [], []>} : vector<16x32xf32>, vector<32x96xf32>, vector<16x96xf32> -> vector<16x96xf32>
    %34 = vector.broadcast %4 : vector<1x96xf32> to vector<16x96xf32>
    %35 = arith.addf %33, %34 : vector<16x96xf32>
    %36 = vector.extract_strided_slice %35 {offsets = [0, 0], sizes = [16, 32], strides = [1, 1]} : vector<16x96xf32> to vector<16x32xf32>
    %cst_10 = arith.constant 0.353553385 : f32
    %37 = vector.broadcast %cst_10 : f32 to vector<16x32xf32>
    %38 = arith.mulf %36, %37 : vector<16x32xf32>
    %39 = vector.extract_strided_slice %35 {offsets = [0, 32], sizes = [16, 32], strides = [1, 1]} : vector<16x96xf32> to vector<16x32xf32>
    %40 = vector.extract_strided_slice %35 {offsets = [0, 64], sizes = [16, 32], strides = [1, 1]} : vector<16x96xf32> to vector<16x32xf32>
    %41 = vector.extract_strided_slice %38 {offsets = [0, 0], sizes = [16, 8], strides = [1, 1]} : vector<16x32xf32> to vector<16x8xf32>
    %42 = vector.shape_cast %41 : vector<16x8xf32> to vector<2x8x8xf32>
    %c0_11 = arith.constant 0 : index
    %c0_12 = arith.constant 0 : index
    %c0_13 = arith.constant 0 : index
    %43 = vector.load %arg8[%c0_11, %c0_12, %c0_13] : memref<8x8x8xf32, #tpu.memory_space<vmem>>, vector<2x8x8xf32>
    tpu.vector_store %arg8[%c0_11, %c0_12, %c0_13], %42 {strides = array<i32>} : memref<8x8x8xf32, #tpu.memory_space<vmem>>, vector<2x8x8xf32>,
    %44 = vector.extract_strided_slice %39 {offsets = [0, 0], sizes = [16, 8], strides = [1, 1]} : vector<16x32xf32> to vector<16x8xf32>
    %45 = vector.shape_cast %44 : vector<16x8xf32> to vector<2x8x8xf32>
    %c0_14 = arith.constant 0 : index
    %c0_15 = arith.constant 0 : index
    %c0_16 = arith.constant 0 : index
    %46 = vector.load %arg9[%c0_14, %c0_15, %c0_16] : memref<8x8x8xf32, #tpu.memory_space<vmem>>, vector<2x8x8xf32>
    tpu.vector_store %arg9[%c0_14, %c0_15, %c0_16], %45 {strides = array<i32>} : memref<8x8x8xf32, #tpu.memory_space<vmem>>, vector<2x8x8xf32>,
    %47 = vector.extract_strided_slice %40 {offsets = [0, 0], sizes = [16, 8], strides = [1, 1]} : vector<16x32xf32> to vector<16x8xf32>
    %48 = vector.shape_cast %47 : vector<16x8xf32> to vector<2x8x8xf32>
    %c0_17 = arith.constant 0 : index
    %c0_18 = arith.constant 0 : index
    %c0_19 = arith.constant 0 : index
    %49 = vector.load %arg10[%c0_17, %c0_18, %c0_19] : memref<8x8x8xf32, #tpu.memory_space<vmem>>, vector<2x8x8xf32>
    tpu.vector_store %arg10[%c0_17, %c0_18, %c0_19], %48 {strides = array<i32>} : memref<8x8x8xf32, #tpu.memory_space<vmem>>, vector<2x8x8xf32>,
    %50 = vector.extract_strided_slice %38 {offsets = [0, 8], sizes = [16, 8], strides = [1, 1]} : vector<16x32xf32> to vector<16x8xf32>
    %51 = vector.shape_cast %50 : vector<16x8xf32> to vector<2x8x8xf32>
    %c2 = arith.constant 2 : index
    %c0_20 = arith.constant 0 : index
    %c0_21 = arith.constant 0 : index
    %52 = vector.load %arg8[%c2, %c0_20, %c0_21] : memref<8x8x8xf32, #tpu.memory_space<vmem>>, vector<2x8x8xf32>
    tpu.vector_store %arg8[%c2, %c0_20, %c0_21], %51 {strides = array<i32>} : memref<8x8x8xf32, #tpu.memory_space<vmem>>, vector<2x8x8xf32>,
    %53 = vector.extract_strided_slice %39 {offsets = [0, 8], sizes = [16, 8], strides = [1, 1]} : vector<16x32xf32> to vector<16x8xf32>
    %54 = vector.shape_cast %53 : vector<16x8xf32> to vector<2x8x8xf32>
    %c2_22 = arith.constant 2 : index
    %c0_23 = arith.constant 0 : index
    %c0_24 = arith.constant 0 : index
    %55 = vector.load %arg9[%c2_22, %c0_23, %c0_24] : memref<8x8x8xf32, #tpu.memory_space<vmem>>, vector<2x8x8xf32>
    tpu.vector_store %arg9[%c2_22, %c0_23, %c0_24], %54 {strides = array<i32>} : memref<8x8x8xf32, #tpu.memory_space<vmem>>, vector<2x8x8xf32>,
    %56 = vector.extract_strided_slice %40 {offsets = [0, 8], sizes = [16, 8], strides = [1, 1]} : vector<16x32xf32> to vector<16x8xf32>
    %57 = vector.shape_cast %56 : vector<16x8xf32> to vector<2x8x8xf32>
    %c2_25 = arith.constant 2 : index
    %c0_26 = arith.constant 0 : index
    %c0_27 = arith.constant 0 : index
    %58 = vector.load %arg10[%c2_25, %c0_26, %c0_27] : memref<8x8x8xf32, #tpu.memory_space<vmem>>, vector<2x8x8xf32>
    tpu.vector_store %arg10[%c2_25, %c0_26, %c0_27], %57 {strides = array<i32>} : memref<8x8x8xf32, #tpu.memory_space<vmem>>, vector<2x8x8xf32>,
    %59 = vector.extract_strided_slice %38 {offsets = [0, 16], sizes = [16, 8], strides = [1, 1]} : vector<16x32xf32> to vector<16x8xf32>
    %60 = vector.shape_cast %59 : vector<16x8xf32> to vector<2x8x8xf32>
    %c4 = arith.constant 4 : index
    %c0_28 = arith.constant 0 : index
    %c0_29 = arith.constant 0 : index
    %61 = vector.load %arg8[%c4, %c0_28, %c0_29] : memref<8x8x8xf32, #tpu.memory_space<vmem>>, vector<2x8x8xf32>
    tpu.vector_store %arg8[%c4, %c0_28, %c0_29], %60 {strides = array<i32>} : memref<8x8x8xf32, #tpu.memory_space<vmem>>, vector<2x8x8xf32>,
    %62 = vector.extract_strided_slice %39 {offsets = [0, 16], sizes = [16, 8], strides = [1, 1]} : vector<16x32xf32> to vector<16x8xf32>
    %63 = vector.shape_cast %62 : vector<16x8xf32> to vector<2x8x8xf32>
    %c4_30 = arith.constant 4 : index
    %c0_31 = arith.constant 0 : index
    %c0_32 = arith.constant 0 : index
    %64 = vector.load %arg9[%c4_30, %c0_31, %c0_32] : memref<8x8x8xf32, #tpu.memory_space<vmem>>, vector<2x8x8xf32>
    tpu.vector_store %arg9[%c4_30, %c0_31, %c0_32], %63 {strides = array<i32>} : memref<8x8x8xf32, #tpu.memory_space<vmem>>, vector<2x8x8xf32>,
    %65 = vector.extract_strided_slice %40 {offsets = [0, 16], sizes = [16, 8], strides = [1, 1]} : vector<16x32xf32> to vector<16x8xf32>
    %66 = vector.shape_cast %65 : vector<16x8xf32> to vector<2x8x8xf32>
    %c4_33 = arith.constant 4 : index
    %c0_34 = arith.constant 0 : index
    %c0_35 = arith.constant 0 : index
    %67 = vector.load %arg10[%c4_33, %c0_34, %c0_35] : memref<8x8x8xf32, #tpu.memory_space<vmem>>, vector<2x8x8xf32>
    tpu.vector_store %arg10[%c4_33, %c0_34, %c0_35], %66 {strides = array<i32>} : memref<8x8x8xf32, #tpu.memory_space<vmem>>, vector<2x8x8xf32>,
    %68 = vector.extract_strided_slice %38 {offsets = [0, 24], sizes = [16, 8], strides = [1, 1]} : vector<16x32xf32> to vector<16x8xf32>
    %69 = vector.shape_cast %68 : vector<16x8xf32> to vector<2x8x8xf32>
    %c6 = arith.constant 6 : index
    %c0_36 = arith.constant 0 : index
    %c0_37 = arith.constant 0 : index
    %70 = vector.load %arg8[%c6, %c0_36, %c0_37] : memref<8x8x8xf32, #tpu.memory_space<vmem>>, vector<2x8x8xf32>
    tpu.vector_store %arg8[%c6, %c0_36, %c0_37], %69 {strides = array<i32>} : memref<8x8x8xf32, #tpu.memory_space<vmem>>, vector<2x8x8xf32>,
    %71 = vector.extract_strided_slice %39 {offsets = [0, 24], sizes = [16, 8], strides = [1, 1]} : vector<16x32xf32> to vector<16x8xf32>
    %72 = vector.shape_cast %71 : vector<16x8xf32> to vector<2x8x8xf32>
    %c6_38 = arith.constant 6 : index
    %c0_39 = arith.constant 0 : index
    %c0_40 = arith.constant 0 : index
    %73 = vector.load %arg9[%c6_38, %c0_39, %c0_40] : memref<8x8x8xf32, #tpu.memory_space<vmem>>, vector<2x8x8xf32>
    tpu.vector_store %arg9[%c6_38, %c0_39, %c0_40], %72 {strides = array<i32>} : memref<8x8x8xf32, #tpu.memory_space<vmem>>, vector<2x8x8xf32>,
    %74 = vector.extract_strided_slice %40 {offsets = [0, 24], sizes = [16, 8], strides = [1, 1]} : vector<16x32xf32> to vector<16x8xf32>
    %75 = vector.shape_cast %74 : vector<16x8xf32> to vector<2x8x8xf32>
    %c6_41 = arith.constant 6 : index
    %c0_42 = arith.constant 0 : index
    %c0_43 = arith.constant 0 : index
    %76 = vector.load %arg10[%c6_41, %c0_42, %c0_43] : memref<8x8x8xf32, #tpu.memory_space<vmem>>, vector<2x8x8xf32>
    tpu.vector_store %arg10[%c6_41, %c0_42, %c0_43], %75 {strides = array<i32>} : memref<8x8x8xf32, #tpu.memory_space<vmem>>, vector<2x8x8xf32>,
    %c0_44 = arith.constant 0 : index
    %c0_45 = arith.constant 0 : index
    %c0_46 = arith.constant 0 : index
    %77 = vector.load %arg8[%c0_44, %c0_45, %c0_46] : memref<8x8x8xf32, #tpu.memory_space<vmem>>, vector<8x8x8xf32>
    %c0_47 = arith.constant 0 : index
    %c0_48 = arith.constant 0 : index
    %c0_49 = arith.constant 0 : index
    %78 = vector.load %arg9[%c0_47, %c0_48, %c0_49] : memref<8x8x8xf32, #tpu.memory_space<vmem>>, vector<8x8x8xf32>
    %c0_50 = arith.constant 0 : index
    %c0_51 = arith.constant 0 : index
    %c0_52 = arith.constant 0 : index
    %79 = vector.load %arg10[%c0_50, %c0_51, %c0_52] : memref<8x8x8xf32, #tpu.memory_space<vmem>>, vector<8x8x8xf32>
    %80 = tpu.iota {dimensions = array<i32: 0>} : vector<8x8xi32>
    %81 = tpu.iota {dimensions = array<i32: 1>} : vector<8x8xi32>
    %82 = arith.cmpi sle, %81, %80 : vector<8x8xi32>
    %cst_53 = arith.constant 0.000000e+00 : f32
    %cst_54 = arith.constant -1.000000e+30 : f32
    %83 = vector.broadcast %cst_53 : f32 to vector<8x8xf32>
    %84 = vector.broadcast %cst_54 : f32 to vector<8x8xf32>
    %85 = arith.select %82, %83, %84 : vector<8x8xi1>, vector<8x8xf32>
    %86 = vector.shape_cast %85 : vector<8x8xf32> to vector<1x8x8xf32>
    "tpu.trace_start"() <{level = 10 : i32, message = "btd,bsd->bts"}> : () -> ()
    %cst_55 = arith.constant dense<0.000000e+00> : vector<8x8x8xf32>
    %87 = tpu.matmul %77, %78, %cst_55 {dimension_numbers = #tpu.dot_dimension_numbers<[2], [2], [1], [1], [0, 0, 0, 1, 1, 1], [0], [0]>} : vector<8x8x8xf32>, vector<8x8x8xf32>, vector<8x8x8xf32> -> vector<8x8x8xf32>
    "tpu.trace_stop"() : () -> ()
    %88 = vector.broadcast %86 : vector<1x8x8xf32> to vector<8x8x8xf32>
    %89 = arith.addf %87, %88 : vector<8x8x8xf32>
    %cst_56 = arith.constant dense<0xFF800000> : vector<8x8xf32>
    %90 = vector.multi_reduction <maximumf>, %89, %cst_56 [2] : vector<8x8x8xf32> to vector<8x8xf32>
    %91 = vector.shape_cast %90 : vector<8x8xf32> to vector<8x8x1xf32>
    %92 = vector.broadcast %91 : vector<8x8x1xf32> to vector<8x8x8xf32>
    %93 = arith.subf %89, %92 : vector<8x8x8xf32>
    %94 = math.exp %93 : vector<8x8x8xf32>
    %cst_57 = arith.constant dense<0.000000e+00> : vector<8x8xf32>
    %95 = vector.multi_reduction <add>, %94, %cst_57 [2] : vector<8x8x8xf32> to vector<8x8xf32>
    %96 = vector.shape_cast %95 : vector<8x8xf32> to vector<8x8x1xf32>
    %97 = tpu.reciprocal %96 {approx = true} : vector<8x8x1xf32> -> vector<8x8x1xf32>
    %98 = vector.broadcast %97 : vector<8x8x1xf32> to vector<8x8x8xf32>
    %99 = arith.mulf %94, %98 : vector<8x8x8xf32>
    "tpu.trace_start"() <{level = 10 : i32, message = "bts,bsd->btd"}> : () -> ()
    %cst_58 = arith.constant dense<0.000000e+00> : vector<8x8x8xf32>
    %100 = tpu.matmul %99, %79, %cst_58 {dimension_numbers = #tpu.dot_dimension_numbers<[2], [1], [1], [2], [0, 0, 0, 1, 1, 2], [0], [0]>} : vector<8x8x8xf32>, vector<8x8x8xf32>, vector<8x8x8xf32> -> vector<8x8x8xf32>
    "tpu.trace_stop"() : () -> ()
    %c0_59 = arith.constant 0 : index
    %c0_60 = arith.constant 0 : index
    %101 = vector.load %arg4[%c0_59, %c0_60] : memref<32x32xf32, #tpu.memory_space<vmem>>, vector<32x32xf32>
    %102 = vector.extract_strided_slice %100 {offsets = [0, 0, 0], sizes = [2, 8, 8], strides = [1, 1, 1]} : vector<8x8x8xf32> to vector<2x8x8xf32>
    %103 = vector.shape_cast %102 : vector<2x8x8xf32> to vector<16x8xf32>
    %104 = vector.extract_strided_slice %101 {offsets = [0, 0], sizes = [8, 32], strides = [1, 1]} : vector<32x32xf32> to vector<8x32xf32>
    %cst_61 = arith.constant dense<0.000000e+00> : vector<16x32xf32>
    %105 = tpu.matmul %103, %104, %cst_61 {dimension_numbers = #tpu.dot_dimension_numbers<[1], [0], [0], [1], [0, 0, 1, 1], [], []>} : vector<16x8xf32>, vector<8x32xf32>, vector<16x32xf32> -> vector<16x32xf32>
    %106 = vector.extract_strided_slice %100 {offsets = [2, 0, 0], sizes = [2, 8, 8], strides = [1, 1, 1]} : vector<8x8x8xf32> to vector<2x8x8xf32>
    %107 = vector.shape_cast %106 : vector<2x8x8xf32> to vector<16x8xf32>
    %108 = vector.extract_strided_slice %101 {offsets = [8, 0], sizes = [8, 32], strides = [1, 1]} : vector<32x32xf32> to vector<8x32xf32>
    %cst_62 = arith.constant dense<0.000000e+00> : vector<16x32xf32>
    %109 = tpu.matmul %107, %108, %cst_62 {dimension_numbers = #tpu.dot_dimension_numbers<[1], [0], [0], [1], [0, 0, 1, 1], [], []>} : vector<16x8xf32>, vector<8x32xf32>, vector<16x32xf32> -> vector<16x32xf32>
    %110 = arith.addf %105, %109 : vector<16x32xf32>
    %111 = vector.extract_strided_slice %100 {offsets = [4, 0, 0], sizes = [2, 8, 8], strides = [1, 1, 1]} : vector<8x8x8xf32> to vector<2x8x8xf32>
    %112 = vector.shape_cast %111 : vector<2x8x8xf32> to vector<16x8xf32>
    %113 = vector.extract_strided_slice %101 {offsets = [16, 0], sizes = [8, 32], strides = [1, 1]} : vector<32x32xf32> to vector<8x32xf32>
    %cst_63 = arith.constant dense<0.000000e+00> : vector<16x32xf32>
    %114 = tpu.matmul %112, %113, %cst_63 {dimension_numbers = #tpu.dot_dimension_numbers<[1], [0], [0], [1], [0, 0, 1, 1], [], []>} : vector<16x8xf32>, vector<8x32xf32>, vector<16x32xf32> -> vector<16x32xf32>
    %115 = arith.addf %110, %114 : vector<16x32xf32>
    %116 = vector.extract_strided_slice %100 {offsets = [6, 0, 0], sizes = [2, 8, 8], strides = [1, 1, 1]} : vector<8x8x8xf32> to vector<2x8x8xf32>
    %117 = vector.shape_cast %116 : vector<2x8x8xf32> to vector<16x8xf32>
    %118 = vector.extract_strided_slice %101 {offsets = [24, 0], sizes = [8, 32], strides = [1, 1]} : vector<32x32xf32> to vector<8x32xf32>
    %cst_64 = arith.constant dense<0.000000e+00> : vector<16x32xf32>
    %119 = tpu.matmul %117, %118, %cst_64 {dimension_numbers = #tpu.dot_dimension_numbers<[1], [0], [0], [1], [0, 0, 1, 1], [], []>} : vector<16x8xf32>, vector<8x32xf32>, vector<16x32xf32> -> vector<16x32xf32>
    %120 = arith.addf %115, %119 : vector<16x32xf32>
    %121 = arith.addf %0, %120 : vector<16x32xf32>
    %122 = vector.broadcast %5 : vector<1x32xf32> to vector<16x32xf32>
    %123 = arith.addf %121, %122 : vector<16x32xf32>
    %cst_65 = arith.constant dense<0.000000e+00> : vector<16xf32>
    %124 = vector.multi_reduction <add>, %123, %cst_65 [1] : vector<16x32xf32> to vector<16xf32>
    %125 = vector.shape_cast %124 : vector<16xf32> to vector<16x1xf32>
    %cst_66 = arith.constant 3.200000e+01 : f32
    %126 = vector.broadcast %cst_66 : f32 to vector<16x1xf32>
    %127 = arith.divf %125, %126 : vector<16x1xf32>
    %128 = vector.broadcast %127 : vector<16x1xf32> to vector<16x32xf32>
    %129 = arith.subf %123, %128 : vector<16x32xf32>
    %130 = arith.mulf %129, %129 : vector<16x32xf32>
    %cst_67 = arith.constant dense<0.000000e+00> : vector<16xf32>
    %131 = vector.multi_reduction <add>, %130, %cst_67 [1] : vector<16x32xf32> to vector<16xf32>
    %132 = vector.shape_cast %131 : vector<16xf32> to vector<16x1xf32>
    %cst_68 = arith.constant 3.200000e+01 : f32
    %133 = vector.broadcast %cst_68 : f32 to vector<16x1xf32>
    %134 = arith.divf %132, %133 : vector<16x1xf32>
    %135 = vector.broadcast %127 : vector<16x1xf32> to vector<16x32xf32>
    %136 = arith.subf %123, %135 : vector<16x32xf32>
    %cst_69 = arith.constant 9.99999974E-6 : f32
    %137 = vector.broadcast %cst_69 : f32 to vector<16x1xf32>
    %138 = arith.addf %134, %137 : vector<16x1xf32>
    %139 = math.rsqrt %138 : vector<16x1xf32>
    %140 = vector.broadcast %139 : vector<16x1xf32> to vector<16x32xf32>
    %141 = arith.mulf %136, %140 : vector<16x32xf32>
    %142 = vector.broadcast %6 : vector<1x32xf32> to vector<16x32xf32>
    %143 = arith.mulf %141, %142 : vector<16x32xf32>
    %144 = vector.broadcast %7 : vector<1x32xf32> to vector<16x32xf32>
    %145 = arith.addf %143, %144 : vector<16x32xf32>
    %c0_70 = arith.constant 0 : index
    %c0_71 = arith.constant 0 : index
    %146 = vector.load %arg5[%c0_70, %c0_71] : memref<32x128xf32, #tpu.memory_space<vmem>>, vector<32x128xf32>
    %cst_72 = arith.constant dense<0.000000e+00> : vector<16x128xf32>
    %147 = tpu.matmul %145, %146, %cst_72 {dimension_numbers = #tpu.dot_dimension_numbers<[1], [0], [0], [1], [0, 0, 1, 1], [], []>} : vector<16x32xf32>, vector<32x128xf32>, vector<16x128xf32> -> vector<16x128xf32>
    %148 = vector.broadcast %8 : vector<1x128xf32> to vector<16x128xf32>
    %149 = arith.addf %147, %148 : vector<16x128xf32>
    %cst_73 = arith.constant 5.000000e-01 : f32
    %150 = vector.broadcast %cst_73 : f32 to vector<16x128xf32>
    %151 = arith.mulf %150, %149 : vector<16x128xf32>
    %cst_74 = arith.constant 4.471500e-02 : f32
    %152 = vector.broadcast %cst_74 : f32 to vector<16x128xf32>
    %153 = arith.mulf %152, %149 : vector<16x128xf32>
    %154 = arith.mulf %153, %149 : vector<16x128xf32>
    %155 = arith.mulf %154, %149 : vector<16x128xf32>
    %156 = arith.addf %149, %155 : vector<16x128xf32>
    %cst_75 = arith.constant 0.797884583 : f32
    %157 = vector.broadcast %cst_75 : f32 to vector<16x128xf32>
    %158 = arith.mulf %157, %156 : vector<16x128xf32>
    %159 = math.tanh %158 : vector<16x128xf32>
    %cst_76 = arith.constant 1.000000e+00 : f32
    %160 = vector.broadcast %cst_76 : f32 to vector<16x128xf32>
    %161 = arith.addf %160, %159 : vector<16x128xf32>
    %162 = arith.mulf %151, %161 : vector<16x128xf32>
    %c0_77 = arith.constant 0 : index
    %c0_78 = arith.constant 0 : index
    %163 = vector.load %arg6[%c0_77, %c0_78] : memref<128x32xf32, #tpu.memory_space<vmem>>, vector<128x32xf32>
    %cst_79 = arith.constant dense<0.000000e+00> : vector<16x32xf32>
    %164 = tpu.matmul %162, %163, %cst_79 {dimension_numbers = #tpu.dot_dimension_numbers<[1], [0], [0], [1], [0, 0, 1, 1], [], []>} : vector<16x128xf32>, vector<128x32xf32>, vector<16x32xf32> -> vector<16x32xf32>
    %165 = vector.broadcast %9 : vector<1x32xf32> to vector<16x32xf32>
    %166 = arith.addf %164, %165 : vector<16x32xf32>
    %167 = arith.addf %123, %166 : vector<16x32xf32>
    %c0_80 = arith.constant 0 : index
    %c0_81 = arith.constant 0 : index
    %168 = vector.load %arg7[%c0_80, %c0_81] : memref<16x32xf32, #tpu.memory_space<vmem>>, vector<16x32xf32>
    tpu.vector_store %arg7[%c0_80, %c0_81], %167 {strides = array<i32>} : memref<16x32xf32, #tpu.memory_space<vmem>>, vector<16x32xf32>,
    return
  }
  func.func @transform_0(%arg0: i32) -> (i32, i32) {
    %c0_i32 = arith.constant 0 : i32
    %c0_i32_0 = arith.constant 0 : i32
    %c0_i32_1 = arith.constant 0 : i32
    return %c0_i32, %c0_i32_0 : i32, i32
  }
  func.func @transform_1(%arg0: i32) -> (i32, i32) {
    %c0_i32 = arith.constant 0 : i32
    %c0_i32_0 = arith.constant 0 : i32
    %c0_i32_1 = arith.constant 0 : i32
    return %c0_i32, %c0_i32_0 : i32, i32
  }
  func.func @transform_2(%arg0: i32) -> (i32, i32) {
    %c0_i32 = arith.constant 0 : i32
    %c0_i32_0 = arith.constant 0 : i32
    %c0_i32_1 = arith.constant 0 : i32
    return %c0_i32, %c0_i32_0 : i32, i32
  }
  func.func @transform_3(%arg0: i32) -> (i32, i32) {
    %c0_i32 = arith.constant 0 : i32
    %c0_i32_0 = arith.constant 0 : i32
    %c0_i32_1 = arith.constant 0 : i32
    return %c0_i32, %c0_i32_0 : i32, i32
  }
  func.func @transform_4(%arg0: i32) -> (i32, i32) {
    %c0_i32 = arith.constant 0 : i32
    %c0_i32_0 = arith.constant 0 : i32
    %c0_i32_1 = arith.constant 0 : i32
    return %c0_i32, %c0_i32_0 : i32, i32
  }
  func.func @transform_5(%arg0: i32) -> (i32, i32) {
    %c0_i32 = arith.constant 0 : i32
    %c0_i32_0 = arith.constant 0 : i32
    %c0_i32_1 = arith.constant 0 : i32
    return %c0_i32, %c0_i32_0 : i32, i32
  }
  func.func @transform_6(%arg0: i32) -> (i32, i32) {
    %c0_i32 = arith.constant 0 : i32
    %c0_i32_0 = arith.constant 0 : i32
    %c0_i32_1 = arith.constant 0 : i32
    return %c0_i32, %c0_i32_0 : i32, i32
  }
}

</mosaic_0001>

<llo_original>
// kernel: tpu_custom_call.1
$region0: #{tpu_custom_call.1}
  #allocation0 [shape = 'u32[]', space=smem, size = 0x4, offset = 0x4, fixed_abs, tag = 'smem constant byte address 0x4 - core index']
  #allocation1 [shape = 'u32[144,128]{1,0:T(1,128)}', space=vmem, size = 0x12000, scoped, tag = 'internal scratch']
  #allocation2 [shape = 'f32[8,8,8]{2,1,0:T(8,128)}', space=vmem, size = 0x8000, scoped, tag = 'scratch operand']
  #allocation3 [shape = 'f32[8,8,8]{2,1,0:T(8,128)}', space=vmem, size = 0x8000, scoped, tag = 'scratch operand']
  #allocation4 [shape = 'f32[8,8,8]{2,1,0:T(8,128)}', space=vmem, size = 0x8000, scoped, tag = 'scratch operand']
  %s0 = inlined_call_operand.vmem [shape: f32[16,32], index: 0, kind: input, shape index: {}]
  %s1 = inlined_call_operand.vmem [shape: f32[8,128], index: 1, kind: input, shape index: {}]
  %s2 = inlined_call_operand.vmem [shape: f32[32,96], index: 2, kind: input, shape index: {}]
  %s3 = inlined_call_operand.vmem [shape: f32[32,32], index: 3, kind: input, shape index: {}]
  %s4 = inlined_call_operand.vmem [shape: f32[32,128], index: 4, kind: input, shape index: {}]
  %s5 = inlined_call_operand.vmem [shape: f32[128,32], index: 5, kind: input, shape index: {}]
  %s6 = inlined_call_operand.hbm [shape: f32[16,32], index: 6, kind: output, shape index: {}]
  %s7 = sld [smem:[#allocation0]]
  $region34: #{tpu_custom_call.1} parent=0
    _
  %s9 = ssub.s32 1, %s7
  %s10 = scalar_select 0, %s9, %s7
  $region1: #{tpu_custom_call.1} parent=0
    #allocation5 [shape = 'u8[8192]{0}', space=vmem, size = 0x2000, scoped, tag = 'output window, operand 0, single buffered']
    #allocation6 [shape = 's32[1]{0}', space=sflag, size = 0x4, scoped, tag = 'scoped memory for tpu_custom_call.1']
    %11 = vsyncpa [#allocation6], 0
    // Predicated region
    $region2: #{tpu_custom_call.1} parent=1 // pred_check
      _
    $region3: #{tpu_custom_call.1} parent=1 // pred_check_branch
      %13 = sbr.rel (0) target = $region5
    $region4: #{tpu_custom_call.1} parent=1 // pred_region
      _
    $region5: #{tpu_custom_call.1} parent=1 // pred_fallthru
      _
    // Predicated region
    $region6: #{tpu_custom_call.1} parent=1 // pred_check
      _
    $region7: #{tpu_custom_call.1} parent=1 // pred_check_branch
      %15 = sbr.rel (0) target = $region9
    $region8: #{tpu_custom_call.1} parent=1 // pred_region
      _
    $region9: #{tpu_custom_call.1} parent=1 // pred_fallthru
      _
    // Predicated region
    $region10: #{tpu_custom_call.1} parent=1 // pred_check
      _
    $region11: #{tpu_custom_call.1} parent=1 // pred_check_branch
      %17 = sbr.rel (0) target = $region13
    $region12: #{tpu_custom_call.1} parent=1 // pred_region
      _
    $region13: #{tpu_custom_call.1} parent=1 // pred_fallthru
      _
    // Predicated region
    $region14: #{tpu_custom_call.1} parent=1 // pred_check
      _
    $region15: #{tpu_custom_call.1} parent=1 // pred_check_branch
      %19 = sbr.rel (0) target = $region17
    $region16: #{tpu_custom_call.1} parent=1 // pred_region
      _
    $region17: #{tpu_custom_call.1} parent=1 // pred_fallthru
      _
    // Predicated region
    $region18: #{tpu_custom_call.1} parent=1 // pred_check
      _
    $region19: #{tpu_custom_call.1} parent=1 // pred_check_branch
      %21 = sbr.rel (0) target = $region21
    $region20: #{tpu_custom_call.1} parent=1 // pred_region
      _
    $region21: #{tpu_custom_call.1} parent=1 // pred_fallthru
      _
    // Predicated region
    $region22: #{tpu_custom_call.1} parent=1 // pred_check
      _
    $region23: #{tpu_custom_call.1} parent=1 // pred_check_branch
      %23 = sbr.rel (0) target = $region25
    $region24: #{tpu_custom_call.1} parent=1 // pred_region
      _
    $region25: #{tpu_custom_call.1} parent=1 // pred_fallthru
      _
    %v24 = vld [vmem:[%s0] sm:$0xff]
    %v25 = vld [vmem:[%s0 + $0x8] sm:$0xff]
    %v26 = vld [vmem:[%s1] sm:$0xff]
    %vm27 = vcmask 261120
    %v28 = vsel %vm27, %v24, 0.0
    %29 = vadd.xlane.f32.xlu0 %v28
    %v30 = vpop.xlane.xlu0 %29
    %v31 = vsel %vm27, %v25, 0.0
    %32 = vadd.xlane.f32.xlu0 %v31
    %v33 = vpop.xlane.xlu0 %32
    %v34 = vrcp.pop 32.0
    %v35 = vmul.f32 %v30, %v34
    %v36 = vmul.f32 %v33, %v34
    %v37 = vsub.f32 %v24, %v35
    %v38 = vsub.f32 %v25, %v36
    %v39 = vmul.f32 %v37, %v37
    %v40 = vmul.f32 %v38, %v38
    %v41 = vsel %vm27, %v39, 0.0
    %42 = vadd.xlane.f32.xlu0 %v41
    %v43 = vpop.xlane.xlu0 %42
    %v44 = vsel %vm27, %v40, 0.0
    %45 = vadd.xlane.f32.xlu0 %v44
    %v46 = vpop.xlane.xlu0 %45
    %v47 = vmul.f32 %v43, %v34
    %v48 = vmul.f32 %v46, %v34
    %v49 = vadd.f32 %v47, 1e-05
    %v50 = vadd.f32 %v48, 1e-05
    %v51 = vrsqrt.pop %v49
    %v52 = vrsqrt.pop %v50
    %v53 = vmul.f32 %v37, %v51
    %v54 = vmul.f32 %v38, %v52
    %v55 = vlaneseq
    %v56 = vshrl.u32 %v55, 7
    %v57 = vsub.s32 0, %v56
    %v58 = vrot.slane %v26, %v57
    %v59 = vmul.f32 %v53, %v58
    %v60 = vmul.f32 %v54, %v58
    %v61 = vlaneseq
    %v62 = vshrl.u32 %v61, 7
    %v63 = vsub.s32 1, %v62
    %v64 = vrot.slane %v26, %v63
    %v65 = vadd.f32 %v59, %v64
    %v66 = vadd.f32 %v60, %v64
    %v67 = vld [vmem:[%s2] sm:$0xff]
    %v68 = vld [vmem:[%s2 + $0x8] sm:$0xff]
    %v69 = vld [vmem:[%s2 + $0x10] sm:$0xff]
    %v70 = vld [vmem:[%s2 + $0x18] sm:$0xff]
    %v71 = vlaneseq
    %v72 = vshrl.u32 %v71, 7
    %v73 = vsub.s32 2, %v72
    %v74 = vrot.slane %v26, %v73
    %v76 = vsel %vm27, %v65, 0
    %v79 = vsel %vm27, %v66, 0
    %81 = vmatprep.subr.mxu0 0.0
    %82 = vmatpush1.msra.mxu0 %v67
    %83 = vmatprep.subr.mxu0 0.0
    %84 = vmatpush1.msra.mxu0 %v68
    %85 = vmatprep.subr.mxu0 0.0
    %86 = vmatpush1.msra.mxu0 %v69
    %87 = vmatprep.subr.mxu0 0.0
    %88 = vmatpush1.msra.mxu0 %v70
    %89 = vmatprep.subr.mxu0 0.0
    %90 = vmatpush1.msra.mxu0 0.0
    %91 = vmatprep.subr.mxu0 0.0
    %92 = vmatpush1.msra.mxu0 0.0
    %93 = vmatprep.subr.mxu0 0.0
    %94 = vmatpush1.msra.mxu0 0.0
    %95 = vmatprep.subr.mxu0 0.0
    %96 = vmatpush1.msra.mxu0 0.0
    %97 = vmatprep.subr.mxu0 0.0
    %98 = vmatpush1.msra.mxu0 0.0
    %99 = vmatprep.subr.mxu0 0.0
    %100 = vmatpush1.msra.mxu0 0.0
    %101 = vmatprep.subr.mxu0 0.0
    %102 = vmatpush1.msra.mxu0 0.0
    %103 = vmatprep.subr.mxu0 0.0
    %104 = vmatpush1.msra.mxu0 0.0
    %105 = vmatprep.subr.mxu0 0.0
    %106 = vmatpush1.msra.mxu0 0.0
    %107 = vmatprep.subr.mxu0 0.0
    %108 = vmatpush1.msra.mxu0 0.0
    %109 = vmatprep.subr.mxu0 0.0
    %110 = vmatpush1.msra.mxu0 0.0
    %111 = vmatprep.subr.mxu0 0.0
    %112 = vmatpush1.msra.mxu0 0.0
    %113 = vmatprep.subr.mxu0 0.0
    %114 = vmatpush1.msra.mxu0 0.0
    %115 = vmatprep.subr.mxu0 0.0
    %116 = vmatpush1.msra.mxu0 0.0
    %117 = vmatprep.subr.mxu0 0.0
    %118 = vmatpush1.msra.mxu0 0.0
    %119 = vmatprep.subr.mxu0 0.0
    %120 = vmatpush1.msra.mxu0 0.0
    %121 = vmatprep.subr.mxu0 0.0
    %122 = vmatpush1.msra.mxu0 0.0
    %123 = vmatprep.subr.mxu0 0.0
    %124 = vmatpush1.msra.mxu0 0.0
    %125 = vmatprep.subr.mxu0 0.0
    %126 = vmatpush1.msra.mxu0 0.0
    %127 = vmatprep.subr.mxu0 0.0
    %128 = vmatpush1.msra.mxu0 0.0
    %129 = vmatprep.subr.mxu0 0.0
    %130 = vmatpush1.msra.mxu0 0.0
    %131 = vmatprep.subr.mxu0 0.0
    %132 = vmatpush1.msra.mxu0 0.0
    %133 = vmatprep.subr.mxu0 0.0
    %134 = vmatpush1.msra.mxu0 0.0
    %135 = vmatprep.subr.mxu0 0.0
    %136 = vmatpush1.msra.mxu0 0.0
    %137 = vmatprep.subr.mxu0 0.0
    %138 = vmatpush1.msra.mxu0 0.0
    %139 = vmatprep.subr.mxu0 0.0
    %140 = vmatpush1.msra.mxu0 0.0
    %141 = vmatprep.subr.mxu0 0.0
    %142 = vmatpush1.msra.mxu0 0.0
    %143 = vmatprep.subr.mxu0 0.0
    %144 = vmatpush1.msra.mxu0 0.0
    %145 = vmatprep.mubr.f32.mxu0 0.0
    %146 = vmatmul.mubr.f32.gmra.mrb[0].mxu0 %v76
    %v147 = vpop.f32.mrb[0].mxu0
    %v148 = vadd.f32 %v74, %v147
    %v149 = vpop.f32.mrb[0].mxu0
    %150 = vmatprep.mubr.f32.mxu0 0.0
    %151 = vmatmul.mubr.f32.gmra.mrb[0].mxu0 %v79
    %v152 = vpop.f32.mrb[0].mxu0
    %v153 = vadd.f32 %v74, %v152
    %v154 = vpop.f32.mrb[0].mxu0
    %155 = vdwg.mxu0
    %v156 = vmul.f32 %v148, 0.35355338
    %v157 = vmul.f32 %v153, 0.35355338
    %vm158 = vcmask 64512
    %159 = vst.msk [vmem:[#allocation2] sm:$0xff] %vm158, %v156
    %160 = vst.msk [vmem:[#allocation2 + $0x8] sm:$0xff] %vm158, %v157
    %163 = vrot.lane.b32.xlu0 %v148, 96
    %v164 = vpop.permute.xlu0 %163
    %165 = vrot.lane.b32.xlu0 %v153, 96
    %v166 = vpop.permute.xlu0 %165
    %169 = vst.msk [vmem:[#allocation3] sm:$0xff] %vm158, %v164
    %170 = vst.msk [vmem:[#allocation3 + $0x8] sm:$0xff] %vm158, %v166
    %171 = vrot.lane.b32.xlu0 %v148, 64
    %v172 = vpop.permute.xlu0 %171
    %173 = vrot.lane.b32.xlu0 %v153, 64
    %v174 = vpop.permute.xlu0 %173
    %177 = vst.msk [vmem:[#allocation4] sm:$0xff] %vm158, %v172
    %178 = vst.msk [vmem:[#allocation4 + $0x8] sm:$0xff] %vm158, %v174
    %181 = vrot.lane.b32.xlu0 %v156, 120
    %v182 = vpop.permute.xlu0 %181
    %183 = vrot.lane.b32.xlu0 %v157, 120
    %v184 = vpop.permute.xlu0 %183
    %s187 = scalar_lea.vmem [#allocation2], 16
    %188 = vst.msk [vmem:[%s187] sm:$0xff] %vm158, %v182
    %189 = vst.msk [vmem:[%s187 + $0x8] sm:$0xff] %vm158, %v184
    %190 = vrot.lane.b32.xlu0 %v148, 88
    %v191 = vpop.permute.xlu0 %190
    %192 = vrot.lane.b32.xlu0 %v153, 88
    %v193 = vpop.permute.xlu0 %192
    %s196 = scalar_lea.vmem [#allocation3], 16
    %197 = vst.msk [vmem:[%s196] sm:$0xff] %vm158, %v191
    %198 = vst.msk [vmem:[%s196 + $0x8] sm:$0xff] %vm158, %v193
    %199 = vrot.lane.b32.xlu0 %v148, 56
    %v200 = vpop.permute.xlu0 %199
    %201 = vrot.lane.b32.xlu0 %v153, 56
    %v202 = vpop.permute.xlu0 %201
    %s205 = scalar_lea.vmem [#allocation4], 16
    %206 = vst.msk [vmem:[%s205] sm:$0xff] %vm158, %v200
    %207 = vst.msk [vmem:[%s205 + $0x8] sm:$0xff] %vm158, %v202
    %208 = vrot.lane.b32.xlu0 %v156, 112
    %v209 = vpop.permute.xlu0 %208
    %210 = vrot.lane.b32.xlu0 %v157, 112
    %v211 = vpop.permute.xlu0 %210
    %s214 = scalar_lea.vmem [#allocation2], 32
    %215 = vst.msk [vmem:[%s214] sm:$0xff] %vm158, %v209
    %216 = vst.msk [vmem:[%s214 + $0x8] sm:$0xff] %vm158, %v211
    %217 = vrot.lane.b32.xlu0 %v148, 80
    %v218 = vpop.permute.xlu0 %217
    %219 = vrot.lane.b32.xlu0 %v153, 80
    %v220 = vpop.permute.xlu0 %219
    %s223 = scalar_lea.vmem [#allocation3], 32
    %224 = vst.msk [vmem:[%s223] sm:$0xff] %vm158, %v218
    %225 = vst.msk [vmem:[%s223 + $0x8] sm:$0xff] %vm158, %v220
    %226 = vrot.lane.b32.xlu0 %v148, 48
    %v227 = vpop.permute.xlu0 %226
    %228 = vrot.lane.b32.xlu0 %v153, 48
    %v229 = vpop.permute.xlu0 %228
    %s232 = scalar_lea.vmem [#allocation4], 32
    %233 = vst.msk [vmem:[%s232] sm:$0xff] %vm158, %v227
    %234 = vst.msk [vmem:[%s232 + $0x8] sm:$0xff] %vm158, %v229
    %235 = vrot.lane.b32.xlu0 %v156, 104
    %v236 = vpop.permute.xlu0 %235
    %237 = vrot.lane.b32.xlu0 %v157, 104
    %v238 = vpop.permute.xlu0 %237
    %s241 = scalar_lea.vmem [#allocation2], 48
    %242 = vst.msk [vmem:[%s241] sm:$0xff] %vm158, %v236
    %243 = vst.msk [vmem:[%s241 + $0x8] sm:$0xff] %vm158, %v238
    %244 = vrot.lane.b32.xlu0 %v148, 72
    %v245 = vpop.permute.xlu0 %244
    %246 = vrot.lane.b32.xlu0 %v153, 72
    %v247 = vpop.permute.xlu0 %246
    %s250 = scalar_lea.vmem [#allocation3], 48
    %251 = vst.msk [vmem:[%s250] sm:$0xff] %vm158, %v245
    %252 = vst.msk [vmem:[%s250 + $0x8] sm:$0xff] %vm158, %v247
    %253 = vrot.lane.b32.xlu0 %v148, 40
    %v254 = vpop.permute.xlu0 %253
    %255 = vrot.lane.b32.xlu0 %v153, 40
    %v256 = vpop.permute.xlu0 %255
    %s259 = scalar_lea.vmem [#allocation4], 48
    %260 = vst.msk [vmem:[%s259] sm:$0xff] %vm158, %v254
    %261 = vst.msk [vmem:[%s259 + $0x8] sm:$0xff] %vm158, %v256
    %v262 = vld [vmem:[#allocation2] sm:$0xff]
    %v263 = vld [vmem:[#allocation2 + $0x8] sm:$0xff]
    %v264 = vld [vmem:[#allocation2 + $0x10] sm:$0xff]
    %v265 = vld [vmem:[#allocation2 + $0x18] sm:$0xff]
    %v266 = vld [vmem:[#allocation2 + $0x20] sm:$0xff]
    %v267 = vld [vmem:[#allocation2 + $0x28] sm:$0xff]
    %v268 = vld [vmem:[#allocation2 + $0x30] sm:$0xff]
    %v269 = vld [vmem:[#allocation2 + $0x38] sm:$0xff]
    %v270 = vld [vmem:[#allocation3] sm:$0xff]
    %v271 = vld [vmem:[#allocation3 + $0x8] sm:$0xff]
    %v272 = vld [vmem:[#allocation3 + $0x10] sm:$0xff]
    %v273 = vld [vmem:[#allocation3 + $0x18] sm:$0xff]
    %v274 = vld [vmem:[#allocation3 + $0x20] sm:$0xff]
    %v275 = vld [vmem:[#allocation3 + $0x28] sm:$0xff]
    %v276 = vld [vmem:[#allocation3 + $0x30] sm:$0xff]
    %v277 = vld [vmem:[#allocation3 + $0x38] sm:$0xff]
    %v278 = vld [vmem:[#allocation4] sm:$0xff]
    %v279 = vld [vmem:[#allocation4 + $0x8] sm:$0xff]
    %v280 = vld [vmem:[#allocation4 + $0x10] sm:$0xff]
    %v281 = vld [vmem:[#allocation4 + $0x18] sm:$0xff]
    %v282 = vld [vmem:[#allocation4 + $0x20] sm:$0xff]
    %v283 = vld [vmem:[#allocation4 + $0x28] sm:$0xff]
    %v284 = vld [vmem:[#allocation4 + $0x30] sm:$0xff]
    %v285 = vld [vmem:[#allocation4 + $0x38] sm:$0xff]
    %v286 = vlaneseq
    %v287 = vshrl.u32 %v286, 7
    %v288 = vlaneseq
    %v289 = vand.u32 %v288, 127
    %vm290 = vcmp.le.s32.totalorder %v289, %v287
    %v291 = vsel %vm290, 0.0, -1e+30
    %v293 = vsel %vm158, %v262, 0
    %v296 = vsel %vm158, %v270, 0
    %298 = vmatprep.subr.mxu0 0.0
    %299 = vmatpush1.xpose.msra.mxu0 %v296
    %300 = vmatprep.subr.mxu0 0.0
    %301 = vmatpush1.xpose.msra.mxu0 0.0
    %302 = vmatprep.subr.mxu0 0.0
    %303 = vmatpush1.xpose.msra.mxu0 0.0
    %304 = vmatprep.subr.mxu0 0.0
    %305 = vmatpush1.xpose.msra.mxu0 0.0
    %306 = vmatprep.subr.mxu0 0.0
    %307 = vmatpush1.xpose.msra.mxu0 0.0
    %308 = vmatprep.subr.mxu0 0.0
    %309 = vmatpush1.xpose.msra.mxu0 0.0
    %310 = vmatprep.subr.mxu0 0.0
    %311 = vmatpush1.xpose.msra.mxu0 0.0
    %312 = vmatprep.subr.mxu0 0.0
    %313 = vmatpush1.xpose.msra.mxu0 0.0
    %314 = vmatprep.subr.mxu0 0.0
    %315 = vmatpush1.xpose.msra.mxu0 0.0
    %316 = vmatprep.subr.mxu0 0.0
    %317 = vmatpush1.xpose.msra.mxu0 0.0
    %318 = vmatprep.subr.mxu0 0.0
    %319 = vmatpush1.xpose.msra.mxu0 0.0
    %320 = vmatprep.subr.mxu0 0.0
    %321 = vmatpush1.xpose.msra.mxu0 0.0
    %322 = vmatprep.subr.mxu0 0.0
    %323 = vmatpush1.xpose.msra.mxu0 0.0
    %324 = vmatprep.subr.mxu0 0.0
    %325 = vmatpush1.xpose.msra.mxu0 0.0
    %326 = vmatprep.subr.mxu0 0.0
    %327 = vmatpush1.xpose.msra.mxu0 0.0
    %328 = vmatprep.subr.mxu0 0.0
    %329 = vmatpush1.xpose.msra.mxu0 0.0
    %330 = vmatprep.subr.mxu0 0.0
    %331 = vmatpush1.xpose.msra.mxu0 0.0
    %332 = vmatprep.subr.mxu0 0.0
    %333 = vmatpush1.xpose.msra.mxu0 0.0
    %334 = vmatprep.subr.mxu0 0.0
    %335 = vmatpush1.xpose.msra.mxu0 0.0
    %336 = vmatprep.subr.mxu0 0.0
    %337 = vmatpush1.xpose.msra.mxu0 0.0
    %338 = vmatprep.subr.mxu0 0.0
    %339 = vmatpush1.xpose.msra.mxu0 0.0
    %340 = vmatprep.subr.mxu0 0.0
    %341 = vmatpush1.xpose.msra.mxu0 0.0
    %342 = vmatprep.subr.mxu0 0.0
    %343 = vmatpush1.xpose.msra.mxu0 0.0
    %344 = vmatprep.subr.mxu0 0.0
    %345 = vmatpush1.xpose.msra.mxu0 0.0
    %346 = vmatprep.subr.mxu0 0.0
    %347 = vmatpush1.xpose.msra.mxu0 0.0
    %348 = vmatprep.subr.mxu0 0.0
    %349 = vmatpush1.xpose.msra.mxu0 0.0
    %350 = vmatprep.subr.mxu0 0.0
    %351 = vmatpush1.xpose.msra.mxu0 0.0
    %352 = vmatprep.subr.mxu0 0.0
    %353 = vmatpush1.xpose.msra.mxu0 0.0
    %354 = vmatprep.subr.mxu0 0.0
    %355 = vmatpush1.xpose.msra.mxu0 0.0
    %356 = vmatprep.subr.mxu0 0.0
    %357 = vmatpush1.xpose.msra.mxu0 0.0
    %358 = vmatprep.subr.mxu0 0.0
    %359 = vmatpush1.xpose.msra.mxu0 0.0
    %360 = vmatprep.subr.mxu0 0.0
    %361 = vmatpush1.xpose.msra.mxu0 0.0
    %362 = vmatprep.mubr.f32.mxu0 0.0
    %363 = vmatmul.mubr.f32.gmra.mrb[0].mxu0 %v293
    %v364 = vpop.f32.mrb[0].mxu0
    %v365 = vadd.f32 %v291, %v364
    %v366 = vpop.f32.mrb[0].mxu0
    %367 = vdwg.mxu0
    %v369 = vsel %vm158, %v263, 0
    %v372 = vsel %vm158, %v271, 0
    %374 = vmatprep.subr.mxu0 0.0
    %375 = vmatpush1.xpose.msra.mxu0 %v372
    %376 = vmatprep.subr.mxu0 0.0
    %377 = vmatpush1.xpose.msra.mxu0 0.0
    %378 = vmatprep.subr.mxu0 0.0
    %379 = vmatpush1.xpose.msra.mxu0 0.0
    %380 = vmatprep.subr.mxu0 0.0
    %381 = vmatpush1.xpose.msra.mxu0 0.0
    %382 = vmatprep.subr.mxu0 0.0
    %383 = vmatpush1.xpose.msra.mxu0 0.0
    %384 = vmatprep.subr.mxu0 0.0
    %385 = vmatpush1.xpose.msra.mxu0 0.0
    %386 = vmatprep.subr.mxu0 0.0
    %387 = vmatpush1.xpose.msra.mxu0 0.0
    %388 = vmatprep.subr.mxu0 0.0
    %389 = vmatpush1.xpose.msra.mxu0 0.0
    %390 = vmatprep.subr.mxu0 0.0
    %391 = vmatpush1.xpose.msra.mxu0 0.0
    %392 = vmatprep.subr.mxu0 0.0
    %393 = vmatpush1.xpose.msra.mxu0 0.0
    %394 = vmatprep.subr.mxu0 0.0
    %395 = vmatpush1.xpose.msra.mxu0 0.0
    %396 = vmatprep.subr.mxu0 0.0
    %397 = vmatpush1.xpose.msra.mxu0 0.0
    %398 = vmatprep.subr.mxu0 0.0
    %399 = vmatpush1.xpose.msra.mxu0 0.0
    %400 = vmatprep.subr.mxu0 0.0
    %401 = vmatpush1.xpose.msra.mxu0 0.0
    %402 = vmatprep.subr.mxu0 0.0
    %403 = vmatpush1.xpose.msra.mxu0 0.0
    %404 = vmatprep.subr.mxu0 0.0
    %405 = vmatpush1.xpose.msra.mxu0 0.0
    %406 = vmatprep.subr.mxu0 0.0
    %407 = vmatpush1.xpose.msra.mxu0 0.0
    %408 = vmatprep.subr.mxu0 0.0
    %409 = vmatpush1.xpose.msra.mxu0 0.0
    %410 = vmatprep.subr.mxu0 0.0
    %411 = vmatpush1.xpose.msra.mxu0 0.0
    %412 = vmatprep.subr.mxu0 0.0
    %413 = vmatpush1.xpose.msra.mxu0 0.0
    %414 = vmatprep.subr.mxu0 0.0
    %415 = vmatpush1.xpose.msra.mxu0 0.0
    %416 = vmatprep.subr.mxu0 0.0
    %417 = vmatpush1.xpose.msra.mxu0 0.0
    %418 = vmatprep.subr.mxu0 0.0
    %419 = vmatpush1.xpose.msra.mxu0 0.0
    %420 = vmatprep.subr.mxu0 0.0
    %421 = vmatpush1.xpose.msra.mxu0 0.0
    %422 = vmatprep.subr.mxu0 0.0
    %423 = vmatpush1.xpose.msra.mxu0 0.0
    %424 = vmatprep.subr.mxu0 0.0
    %425 = vmatpush1.xpose.msra.mxu0 0.0
    %426 = vmatprep.subr.mxu0 0.0
    %427 = vmatpush1.xpose.msra.mxu0 0.0
    %428 = vmatprep.subr.mxu0 0.0
    %429 = vmatpush1.xpose.msra.mxu0 0.0
    %430 = vmatprep.subr.mxu0 0.0
    %431 = vmatpush1.xpose.msra.mxu0 0.0
    %432 = vmatprep.subr.mxu0 0.0
    %433 = vmatpush1.xpose.msra.mxu0 0.0
    %434 = vmatprep.subr.mxu0 0.0
    %435 = vmatpush1.xpose.msra.mxu0 0.0
    %436 = vmatprep.subr.mxu0 0.0
    %437 = vmatpush1.xpose.msra.mxu0 0.0
    %438 = vmatprep.mubr.f32.mxu0 0.0
    %439 = vmatmul.mubr.f32.gmra.mrb[0].mxu0 %v369
    %v440 = vpop.f32.mrb[0].mxu0
    %v441 = vadd.f32 %v291, %v440
    %v442 = vpop.f32.mrb[0].mxu0
    %443 = vdwg.mxu0
    %v445 = vsel %vm158, %v264, 0
    %v448 = vsel %vm158, %v272, 0
    %450 = vmatprep.subr.mxu0 0.0
    %451 = vmatpush1.xpose.msra.mxu0 %v448
    %452 = vmatprep.subr.mxu0 0.0
    %453 = vmatpush1.xpose.msra.mxu0 0.0
    %454 = vmatprep.subr.mxu0 0.0
    %455 = vmatpush1.xpose.msra.mxu0 0.0
    %456 = vmatprep.subr.mxu0 0.0
    %457 = vmatpush1.xpose.msra.mxu0 0.0
    %458 = vmatprep.subr.mxu0 0.0
    %459 = vmatpush1.xpose.msra.mxu0 0.0
    %460 = vmatprep.subr.mxu0 0.0
    %461 = vmatpush1.xpose.msra.mxu0 0.0
    %462 = vmatprep.subr.mxu0 0.0
    %463 = vmatpush1.xpose.msra.mxu0 0.0
    %464 = vmatprep.subr.mxu0 0.0
    %465 = vmatpush1.xpose.msra.mxu0 0.0
    %466 = vmatprep.subr.mxu0 0.0
    %467 = vmatpush1.xpose.msra.mxu0 0.0
    %468 = vmatprep.subr.mxu0 0.0
    %469 = vmatpush1.xpose.msra.mxu0 0.0
    %470 = vmatprep.subr.mxu0 0.0
    %471 = vmatpush1.xpose.msra.mxu0 0.0
    %472 = vmatprep.subr.mxu0 0.0
    %473 = vmatpush1.xpose.msra.mxu0 0.0
    %474 = vmatprep.subr.mxu0 0.0
    %475 = vmatpush1.xpose.msra.mxu0 0.0
    %476 = vmatprep.subr.mxu0 0.0
    %477 = vmatpush1.xpose.msra.mxu0 0.0
    %478 = vmatprep.subr.mxu0 0.0
    %479 = vmatpush1.xpose.msra.mxu0 0.0
    %480 = vmatprep.subr.mxu0 0.0
    %481 = vmatpush1.xpose.msra.mxu0 0.0
    %482 = vmatprep.subr.mxu0 0.0
    %483 = vmatpush1.xpose.msra.mxu0 0.0
    %484 = vmatprep.subr.mxu0 0.0
    %485 = vmatpush1.xpose.msra.mxu0 0.0
    %486 = vmatprep.subr.mxu0 0.0
    %487 = vmatpush1.xpose.msra.mxu0 0.0
    %488 = vmatprep.subr.mxu0 0.0
    %489 = vmatpush1.xpose.msra.mxu0 0.0
    %490 = vmatprep.subr.mxu0 0.0
    %491 = vmatpush1.xpose.msra.mxu0 0.0
    %492 = vmatprep.subr.mxu0 0.0
    %493 = vmatpush1.xpose.msra.mxu0 0.0
    %494 = vmatprep.subr.mxu0 0.0
    %495 = vmatpush1.xpose.msra.mxu0 0.0
    %496 = vmatprep.subr.mxu0 0.0
    %497 = vmatpush1.xpose.msra.mxu0 0.0
    %498 = vmatprep.subr.mxu0 0.0
    %499 = vmatpush1.xpose.msra.mxu0 0.0
    %500 = vmatprep.subr.mxu0 0.0
    %501 = vmatpush1.xpose.msra.mxu0 0.0
    %502 = vmatprep.subr.mxu0 0.0
    %503 = vmatpush1.xpose.msra.mxu0 0.0
    %504 = vmatprep.subr.mxu0 0.0
    %505 = vmatpush1.xpose.msra.mxu0 0.0
    %506 = vmatprep.subr.mxu0 0.0
    %507 = vmatpush1.xpose.msra.mxu0 0.0
    %508 = vmatprep.subr.mxu0 0.0
    %509 = vmatpush1.xpose.msra.mxu0 0.0
    %510 = vmatprep.subr.mxu0 0.0
    %511 = vmatpush1.xpose.msra.mxu0 0.0
    %512 = vmatprep.subr.mxu0 0.0
    %513 = vmatpush1.xpose.msra.mxu0 0.0
    %514 = vmatprep.mubr.f32.mxu0 0.0
    %515 = vmatmul.mubr.f32.gmra.mrb[0].mxu0 %v445
    %v516 = vpop.f32.mrb[0].mxu0
    %v517 = vadd.f32 %v291, %v516
    %v518 = vpop.f32.mrb[0].mxu0
    %519 = vdwg.mxu0
    %v521 = vsel %vm158, %v265, 0
    %v524 = vsel %vm158, %v273, 0
    %526 = vmatprep.subr.mxu0 0.0
    %527 = vmatpush1.xpose.msra.mxu0 %v524
    %528 = vmatprep.subr.mxu0 0.0
    %529 = vmatpush1.xpose.msra.mxu0 0.0
    %530 = vmatprep.subr.mxu0 0.0
    %531 = vmatpush1.xpose.msra.mxu0 0.0
    %532 = vmatprep.subr.mxu0 0.0
    %533 = vmatpush1.xpose.msra.mxu0 0.0
    %534 = vmatprep.subr.mxu0 0.0
    %535 = vmatpush1.xpose.msra.mxu0 0.0
    %536 = vmatprep.subr.mxu0 0.0
    %537 = vmatpush1.xpose.msra.mxu0 0.0
    %538 = vmatprep.subr.mxu0 0.0
    %539 = vmatpush1.xpose.msra.mxu0 0.0
    %540 = vmatprep.subr.mxu0 0.0
    %541 = vmatpush1.xpose.msra.mxu0 0.0
    %542 = vmatprep.subr.mxu0 0.0
    %543 = vmatpush1.xpose.msra.mxu0 0.0
    %544 = vmatprep.subr.mxu0 0.0
    %545 = vmatpush1.xpose.msra.mxu0 0.0
    %546 = vmatprep.subr.mxu0 0.0
    %547 = vmatpush1.xpose.msra.mxu0 0.0
    %548 = vmatprep.subr.mxu0 0.0
    %549 = vmatpush1.xpose.msra.mxu0 0.0
    %550 = vmatprep.subr.mxu0 0.0
    %551 = vmatpush1.xpose.msra.mxu0 0.0
    %552 = vmatprep.subr.mxu0 0.0
    %553 = vmatpush1.xpose.msra.mxu0 0.0
    %554 = vmatprep.subr.mxu0 0.0
    %555 = vmatpush1.xpose.msra.mxu0 0.0
    %556 = vmatprep.subr.mxu0 0.0
    %557 = vmatpush1.xpose.msra.mxu0 0.0
    %558 = vmatprep.subr.mxu0 0.0
    %559 = vmatpush1.xpose.msra.mxu0 0.0
    %560 = vmatprep.subr.mxu0 0.0
    %561 = vmatpush1.xpose.msra.mxu0 0.0
    %562 = vmatprep.subr.mxu0 0.0
    %563 = vmatpush1.xpose.msra.mxu0 0.0
    %564 = vmatprep.subr.mxu0 0.0
    %565 = vmatpush1.xpose.msra.mxu0 0.0
    %566 = vmatprep.subr.mxu0 0.0
    %567 = vmatpush1.xpose.msra.mxu0 0.0
    %568 = vmatprep.subr.mxu0 0.0
    %569 = vmatpush1.xpose.msra.mxu0 0.0
    %570 = vmatprep.subr.mxu0 0.0
    %571 = vmatpush1.xpose.msra.mxu0 0.0
    %572 = vmatprep.subr.mxu0 0.0
    %573 = vmatpush1.xpose.msra.mxu0 0.0
    %574 = vmatprep.subr.mxu0 0.0
    %575 = vmatpush1.xpose.msra.mxu0 0.0
    %576 = vmatprep.subr.mxu0 0.0
    %577 = vmatpush1.xpose.msra.mxu0 0.0
    %578 = vmatprep.subr.mxu0 0.0
    %579 = vmatpush1.xpose.msra.mxu0 0.0
    %580 = vmatprep.subr.mxu0 0.0
    %581 = vmatpush1.xpose.msra.mxu0 0.0
    %582 = vmatprep.subr.mxu0 0.0
    %583 = vmatpush1.xpose.msra.mxu0 0.0
    %584 = vmatprep.subr.mxu0 0.0
    %585 = vmatpush1.xpose.msra.mxu0 0.0
    %586 = vmatprep.subr.mxu0 0.0
    %587 = vmatpush1.xpose.msra.mxu0 0.0
    %588 = vmatprep.subr.mxu0 0.0
    %589 = vmatpush1.xpose.msra.mxu0 0.0
    %590 = vmatprep.mubr.f32.mxu0 0.0
    %591 = vmatmul.mubr.f32.gmra.mrb[0].mxu0 %v521
    %v592 = vpop.f32.mrb[0].mxu0
    %v593 = vadd.f32 %v291, %v592
    %v594 = vpop.f32.mrb[0].mxu0
    %595 = vdwg.mxu0
    %v597 = vsel %vm158, %v266, 0
    %v600 = vsel %vm158, %v274, 0
    %602 = vmatprep.subr.mxu0 0.0
    %603 = vmatpush1.xpose.msra.mxu0 %v600
    %604 = vmatprep.subr.mxu0 0.0
    %605 = vmatpush1.xpose.msra.mxu0 0.0
    %606 = vmatprep.subr.mxu0 0.0
    %607 = vmatpush1.xpose.msra.mxu0 0.0
    %608 = vmatprep.subr.mxu0 0.0
    %609 = vmatpush1.xpose.msra.mxu0 0.0
    %610 = vmatprep.subr.mxu0 0.0
    %611 = vmatpush1.xpose.msra.mxu0 0.0
    %612 = vmatprep.subr.mxu0 0.0
    %613 = vmatpush1.xpose.msra.mxu0 0.0
    %614 = vmatprep.subr.mxu0 0.0
    %615 = vmatpush1.xpose.msra.mxu0 0.0
    %616 = vmatprep.subr.mxu0 0.0
    %617 = vmatpush1.xpose.msra.mxu0 0.0
    %618 = vmatprep.subr.mxu0 0.0
    %619 = vmatpush1.xpose.msra.mxu0 0.0
    %620 = vmatprep.subr.mxu0 0.0
    %621 = vmatpush1.xpose.msra.mxu0 0.0
    %622 = vmatprep.subr.mxu0 0.0
    %623 = vmatpush1.xpose.msra.mxu0 0.0
    %624 = vmatprep.subr.mxu0 0.0
    %625 = vmatpush1.xpose.msra.mxu0 0.0
    %626 = vmatprep.subr.mxu0 0.0
    %627 = vmatpush1.xpose.msra.mxu0 0.0
    %628 = vmatprep.subr.mxu0 0.0
    %629 = vmatpush1.xpose.msra.mxu0 0.0
    %630 = vmatprep.subr.mxu0 0.0
    %631 = vmatpush1.xpose.msra.mxu0 0.0
    %632 = vmatprep.subr.mxu0 0.0
    %633 = vmatpush1.xpose.msra.mxu0 0.0
    %634 = vmatprep.subr.mxu0 0.0
    %635 = vmatpush1.xpose.msra.mxu0 0.0
    %636 = vmatprep.subr.mxu0 0.0
    %637 = vmatpush1.xpose.msra.mxu0 0.0
    %638 = vmatprep.subr.mxu0 0.0
    %639 = vmatpush1.xpose.msra.mxu0 0.0
    %640 = vmatprep.subr.mxu0 0.0
    %641 = vmatpush1.xpose.msra.mxu0 0.0
    %642 = vmatprep.subr.mxu0 0.0
    %643 = vmatpush1.xpose.msra.mxu0 0.0
    %644 = vmatprep.subr.mxu0 0.0
    %645 = vmatpush1.xpose.msra.mxu0 0.0
    %646 = vmatprep.subr.mxu0 0.0
    %647 = vmatpush1.xpose.msra.mxu0 0.0
    %648 = vmatprep.subr.mxu0 0.0
    %649 = vmatpush1.xpose.msra.mxu0 0.0
    %650 = vmatprep.subr.mxu0 0.0
    %651 = vmatpush1.xpose.msra.mxu0 0.0
    %652 = vmatprep.subr.mxu0 0.0
    %653 = vmatpush1.xpose.msra.mxu0 0.0
    %654 = vmatprep.subr.mxu0 0.0
    %655 = vmatpush1.xpose.msra.mxu0 0.0
    %656 = vmatprep.subr.mxu0 0.0
    %657 = vmatpush1.xpose.msra.mxu0 0.0
    %658 = vmatprep.subr.mxu0 0.0
    %659 = vmatpush1.xpose.msra.mxu0 0.0
    %660 = vmatprep.subr.mxu0 0.0
    %661 = vmatpush1.xpose.msra.mxu0 0.0
    %662 = vmatprep.subr.mxu0 0.0
    %663 = vmatpush1.xpose.msra.mxu0 0.0
    %664 = vmatprep.subr.mxu0 0.0
    %665 = vmatpush1.xpose.msra.mxu0 0.0
    %666 = vmatprep.mubr.f32.mxu0 0.0
    %667 = vmatmul.mubr.f32.gmra.mrb[0].mxu0 %v597
    %v668 = vpop.f32.mrb[0].mxu0
    %v669 = vadd.f32 %v291, %v668
    %v670 = vpop.f32.mrb[0].mxu0
    %671 = vdwg.mxu0
    %v673 = vsel %vm158, %v267, 0
    %v676 = vsel %vm158, %v275, 0
    %678 = vmatprep.subr.mxu0 0.0
    %679 = vmatpush1.xpose.msra.mxu0 %v676
    %680 = vmatprep.subr.mxu0 0.0
    %681 = vmatpush1.xpose.msra.mxu0 0.0
    %682 = vmatprep.subr.mxu0 0.0
    %683 = vmatpush1.xpose.msra.mxu0 0.0
    %684 = vmatprep.subr.mxu0 0.0
    %685 = vmatpush1.xpose.msra.mxu0 0.0
    %686 = vmatprep.subr.mxu0 0.0
    %687 = vmatpush1.xpose.msra.mxu0 0.0
    %688 = vmatprep.subr.mxu0 0.0
    %689 = vmatpush1.xpose.msra.mxu0 0.0
    %690 = vmatprep.subr.mxu0 0.0
    %691 = vmatpush1.xpose.msra.mxu0 0.0
    %692 = vmatprep.subr.mxu0 0.0
    %693 = vmatpush1.xpose.msra.mxu0 0.0
    %694 = vmatprep.subr.mxu0 0.0
    %695 = vmatpush1.xpose.msra.mxu0 0.0
    %696 = vmatprep.subr.mxu0 0.0
    %697 = vmatpush1.xpose.msra.mxu0 0.0
    %698 = vmatprep.subr.mxu0 0.0
    %699 = vmatpush1.xpose.msra.mxu0 0.0
    %700 = vmatprep.subr.mxu0 0.0
    %701 = vmatpush1.xpose.msra.mxu0 0.0
    %702 = vmatprep.subr.mxu0 0.0
    %703 = vmatpush1.xpose.msra.mxu0 0.0
    %704 = vmatprep.subr.mxu0 0.0
    %705 = vmatpush1.xpose.msra.mxu0 0.0
    %706 = vmatprep.subr.mxu0 0.0
    %707 = vmatpush1.xpose.msra.mxu0 0.0
    %708 = vmatprep.subr.mxu0 0.0
    %709 = vmatpush1.xpose.msra.mxu0 0.0
    %710 = vmatprep.subr.mxu0 0.0
    %711 = vmatpush1.xpose.msra.mxu0 0.0
    %712 = vmatprep.subr.mxu0 0.0
    %713 = vmatpush1.xpose.msra.mxu0 0.0
    %714 = vmatprep.subr.mxu0 0.0
    %715 = vmatpush1.xpose.msra.mxu0 0.0
    %716 = vmatprep.subr.mxu0 0.0
    %717 = vmatpush1.xpose.msra.mxu0 0.0
    %718 = vmatprep.subr.mxu0 0.0
    %719 = vmatpush1.xpose.msra.mxu0 0.0
    %720 = vmatprep.subr.mxu0 0.0
    %721 = vmatpush1.xpose.msra.mxu0 0.0
    %722 = vmatprep.subr.mxu0 0.0
    %723 = vmatpush1.xpose.msra.mxu0 0.0
    %724 = vmatprep.subr.mxu0 0.0
    %725 = vmatpush1.xpose.msra.mxu0 0.0
    %726 = vmatprep.subr.mxu0 0.0
    %727 = vmatpush1.xpose.msra.mxu0 0.0
    %728 = vmatprep.subr.mxu0 0.0
    %729 = vmatpush1.xpose.msra.mxu0 0.0
    %730 = vmatprep.subr.mxu0 0.0
    %731 = vmatpush1.xpose.msra.mxu0 0.0
    %732 = vmatprep.subr.mxu0 0.0
    %733 = vmatpush1.xpose.msra.mxu0 0.0
    %734 = vmatprep.subr.mxu0 0.0
    %735 = vmatpush1.xpose.msra.mxu0 0.0
    %736 = vmatprep.subr.mxu0 0.0
    %737 = vmatpush1.xpose.msra.mxu0 0.0
    %738 = vmatprep.subr.mxu0 0.0
    %739 = vmatpush1.xpose.msra.mxu0 0.0
    %740 = vmatprep.subr.mxu0 0.0
    %741 = vmatpush1.xpose.msra.mxu0 0.0
    %742 = vmatprep.mubr.f32.mxu0 0.0
    %743 = vmatmul.mubr.f32.gmra.mrb[0].mxu0 %v673
    %v744 = vpop.f32.mrb[0].mxu0
    %v745 = vadd.f32 %v291, %v744
    %v746 = vpop.f32.mrb[0].mxu0
    %747 = vdwg.mxu0
    %v749 = vsel %vm158, %v268, 0
    %v752 = vsel %vm158, %v276, 0
    %754 = vmatprep.subr.mxu0 0.0
    %755 = vmatpush1.xpose.msra.mxu0 %v752
    %756 = vmatprep.subr.mxu0 0.0
    %757 = vmatpush1.xpose.msra.mxu0 0.0
    %758 = vmatprep.subr.mxu0 0.0
    %759 = vmatpush1.xpose.msra.mxu0 0.0
    %760 = vmatprep.subr.mxu0 0.0
    %761 = vmatpush1.xpose.msra.mxu0 0.0
    %762 = vmatprep.subr.mxu0 0.0
    %763 = vmatpush1.xpose.msra.mxu0 0.0
    %764 = vmatprep.subr.mxu0 0.0
    %765 = vmatpush1.xpose.msra.mxu0 0.0
    %766 = vmatprep.subr.mxu0 0.0
    %767 = vmatpush1.xpose.msra.mxu0 0.0
    %768 = vmatprep.subr.mxu0 0.0
    %769 = vmatpush1.xpose.msra.mxu0 0.0
    %770 = vmatprep.subr.mxu0 0.0
    %771 = vmatpush1.xpose.msra.mxu0 0.0
    %772 = vmatprep.subr.mxu0 0.0
    %773 = vmatpush1.xpose.msra.mxu0 0.0
    %774 = vmatprep.subr.mxu0 0.0
    %775 = vmatpush1.xpose.msra.mxu0 0.0
    %776 = vmatprep.subr.mxu0 0.0
    %777 = vmatpush1.xpose.msra.mxu0 0.0
    %778 = vmatprep.subr.mxu0 0.0
    %779 = vmatpush1.xpose.msra.mxu0 0.0
    %780 = vmatprep.subr.mxu0 0.0
    %781 = vmatpush1.xpose.msra.mxu0 0.0
    %782 = vmatprep.subr.mxu0 0.0
    %783 = vmatpush1.xpose.msra.mxu0 0.0
    %784 = vmatprep.subr.mxu0 0.0
    %785 = vmatpush1.xpose.msra.mxu0 0.0
    %786 = vmatprep.subr.mxu0 0.0
    %787 = vmatpush1.xpose.msra.mxu0 0.0
    %788 = vmatprep.subr.mxu0 0.0
    %789 = vmatpush1.xpose.msra.mxu0 0.0
    %790 = vmatprep.subr.mxu0 0.0
    %791 = vmatpush1.xpose.msra.mxu0 0.0
    %792 = vmatprep.subr.mxu0 0.0
    %793 = vmatpush1.xpose.msra.mxu0 0.0
    %794 = vmatprep.subr.mxu0 0.0
    %795 = vmatpush1.xpose.msra.mxu0 0.0
    %796 = vmatprep.subr.mxu0 0.0
    %797 = vmatpush1.xpose.msra.mxu0 0.0
    %798 = vmatprep.subr.mxu0 0.0
    %799 = vmatpush1.xpose.msra.mxu0 0.0
    %800 = vmatprep.subr.mxu0 0.0
    %801 = vmatpush1.xpose.msra.mxu0 0.0
    %802 = vmatprep.subr.mxu0 0.0
    %803 = vmatpush1.xpose.msra.mxu0 0.0
    %804 = vmatprep.subr.mxu0 0.0
    %805 = vmatpush1.xpose.msra.mxu0 0.0
    %806 = vmatprep.subr.mxu0 0.0
    %807 = vmatpush1.xpose.msra.mxu0 0.0
    %808 = vmatprep.subr.mxu0 0.0
    %809 = vmatpush1.xpose.msra.mxu0 0.0
    %810 = vmatprep.subr.mxu0 0.0
    %811 = vmatpush1.xpose.msra.mxu0 0.0
    %812 = vmatprep.subr.mxu0 0.0
    %813 = vmatpush1.xpose.msra.mxu0 0.0
    %814 = vmatprep.subr.mxu0 0.0
    %815 = vmatpush1.xpose.msra.mxu0 0.0
    %816 = vmatprep.subr.mxu0 0.0
    %817 = vmatpush1.xpose.msra.mxu0 0.0
    %818 = vmatprep.mubr.f32.mxu0 0.0
    %819 = vmatmul.mubr.f32.gmra.mrb[0].mxu0 %v749
    %v820 = vpop.f32.mrb[0].mxu0
    %v821 = vadd.f32 %v291, %v820
    %v822 = vpop.f32.mrb[0].mxu0
    %823 = vdwg.mxu0
    %v825 = vsel %vm158, %v269, 0
    %v828 = vsel %vm158, %v277, 0
    %830 = vmatprep.subr.mxu0 0.0
    %831 = vmatpush1.xpose.msra.mxu0 %v828
    %832 = vmatprep.subr.mxu0 0.0
    %833 = vmatpush1.xpose.msra.mxu0 0.0
    %834 = vmatprep.subr.mxu0 0.0
    %835 = vmatpush1.xpose.msra.mxu0 0.0
    %836 = vmatprep.subr.mxu0 0.0
    %837 = vmatpush1.xpose.msra.mxu0 0.0
    %838 = vmatprep.subr.mxu0 0.0
    %839 = vmatpush1.xpose.msra.mxu0 0.0
    %840 = vmatprep.subr.mxu0 0.0
    %841 = vmatpush1.xpose.msra.mxu0 0.0
    %842 = vmatprep.subr.mxu0 0.0
    %843 = vmatpush1.xpose.msra.mxu0 0.0
    %844 = vmatprep.subr.mxu0 0.0
    %845 = vmatpush1.xpose.msra.mxu0 0.0
    %846 = vmatprep.subr.mxu0 0.0
    %847 = vmatpush1.xpose.msra.mxu0 0.0
    %848 = vmatprep.subr.mxu0 0.0
    %849 = vmatpush1.xpose.msra.mxu0 0.0
    %850 = vmatprep.subr.mxu0 0.0
    %851 = vmatpush1.xpose.msra.mxu0 0.0
    %852 = vmatprep.subr.mxu0 0.0
    %853 = vmatpush1.xpose.msra.mxu0 0.0
    %854 = vmatprep.subr.mxu0 0.0
    %855 = vmatpush1.xpose.msra.mxu0 0.0
    %856 = vmatprep.subr.mxu0 0.0
    %857 = vmatpush1.xpose.msra.mxu0 0.0
    %858 = vmatprep.subr.mxu0 0.0
    %859 = vmatpush1.xpose.msra.mxu0 0.0
    %860 = vmatprep.subr.mxu0 0.0
    %861 = vmatpush1.xpose.msra.mxu0 0.0
    %862 = vmatprep.subr.mxu0 0.0
    %863 = vmatpush1.xpose.msra.mxu0 0.0
    %864 = vmatprep.subr.mxu0 0.0
    %865 = vmatpush1.xpose.msra.mxu0 0.0
    %866 = vmatprep.subr.mxu0 0.0
    %867 = vmatpush1.xpose.msra.mxu0 0.0
    %868 = vmatprep.subr.mxu0 0.0
    %869 = vmatpush1.xpose.msra.mxu0 0.0
    %870 = vmatprep.subr.mxu0 0.0
    %871 = vmatpush1.xpose.msra.mxu0 0.0
    %872 = vmatprep.subr.mxu0 0.0
    %873 = vmatpush1.xpose.msra.mxu0 0.0
    %874 = vmatprep.subr.mxu0 0.0
    %875 = vmatpush1.xpose.msra.mxu0 0.0
    %876 = vmatprep.subr.mxu0 0.0
    %877 = vmatpush1.xpose.msra.mxu0 0.0
    %878 = vmatprep.subr.mxu0 0.0
    %879 = vmatpush1.xpose.msra.mxu0 0.0
    %880 = vmatprep.subr.mxu0 0.0
    %881 = vmatpush1.xpose.msra.mxu0 0.0
    %882 = vmatprep.subr.mxu0 0.0
    %883 = vmatpush1.xpose.msra.mxu0 0.0
    %884 = vmatprep.subr.mxu0 0.0
    %885 = vmatpush1.xpose.msra.mxu0 0.0
    %886 = vmatprep.subr.mxu0 0.0
    %887 = vmatpush1.xpose.msra.mxu0 0.0
    %888 = vmatprep.subr.mxu0 0.0
    %889 = vmatpush1.xpose.msra.mxu0 0.0
    %890 = vmatprep.subr.mxu0 0.0
    %891 = vmatpush1.xpose.msra.mxu0 0.0
    %892 = vmatprep.subr.mxu0 0.0
    %893 = vmatpush1.xpose.msra.mxu0 0.0
    %894 = vmatprep.mubr.f32.mxu0 0.0
    %895 = vmatmul.mubr.f32.gmra.mrb[0].mxu0 %v825
    %v896 = vpop.f32.mrb[0].mxu0
    %v897 = vadd.f32 %v291, %v896
    %v898 = vpop.f32.mrb[0].mxu0
    %899 = vdwg.mxu0
    %v900 = vsel %vm158, %v365, -inf
    %901 = vmax.xlane.f32.xlu0 %v900
    %v902 = vpop.xlane.xlu0 %901
    %v903 = vsel %vm158, %v441, -inf
    %904 = vmax.xlane.f32.xlu0 %v903
    %v905 = vpop.xlane.xlu0 %904
    %v906 = vsel %vm158, %v517, -inf
    %907 = vmax.xlane.f32.xlu0 %v906
    %v908 = vpop.xlane.xlu0 %907
    %v909 = vsel %vm158, %v593, -inf
    %910 = vmax.xlane.f32.xlu0 %v909
    %v911 = vpop.xlane.xlu0 %910
    %v912 = vsel %vm158, %v669, -inf
    %913 = vmax.xlane.f32.xlu0 %v912
    %v914 = vpop.xlane.xlu0 %913
    %v915 = vsel %vm158, %v745, -inf
    %916 = vmax.xlane.f32.xlu0 %v915
    %v917 = vpop.xlane.xlu0 %916
    %v918 = vsel %vm158, %v821, -inf
    %919 = vmax.xlane.f32.xlu0 %v918
    %v920 = vpop.xlane.xlu0 %919
    %v921 = vsel %vm158, %v897, -inf
    %922 = vmax.xlane.f32.xlu0 %v921
    %v923 = vpop.xlane.xlu0 %922
    %v924 = vsub.f32 %v365, %v902
    %v925 = vsub.f32 %v441, %v905
    %v926 = vsub.f32 %v517, %v908
    %v927 = vsub.f32 %v593, %v911
    %v928 = vsub.f32 %v669, %v914
    %v929 = vsub.f32 %v745, %v917
    %v930 = vsub.f32 %v821, %v920
    %v931 = vsub.f32 %v897, %v923
    %v932 = vmul.f32 %v924, 1.442695
    %v933 = vpow.pop %v932
    %v934 = vmul.f32 %v925, 1.442695
    %v935 = vpow.pop %v934
    %v936 = vmul.f32 %v926, 1.442695
    %v937 = vpow.pop %v936
    %v938 = vmul.f32 %v927, 1.442695
    %v939 = vpow.pop %v938
    %v940 = vmul.f32 %v928, 1.442695
    %v941 = vpow.pop %v940
    %v942 = vmul.f32 %v929, 1.442695
    %v943 = vpow.pop %v942
    %v944 = vmul.f32 %v930, 1.442695
    %v945 = vpow.pop %v944
    %v946 = vmul.f32 %v931, 1.442695
    %v947 = vpow.pop %v946
    %v948 = vsel %vm158, %v933, 0.0
    %949 = vadd.xlane.f32.xlu0 %v948
    %v950 = vpop.xlane.xlu0 %949
    %v951 = vsel %vm158, %v935, 0.0
    %952 = vadd.xlane.f32.xlu0 %v951
    %v953 = vpop.xlane.xlu0 %952
    %v954 = vsel %vm158, %v937, 0.0
    %955 = vadd.xlane.f32.xlu0 %v954
    %v956 = vpop.xlane.xlu0 %955
    %v957 = vsel %vm158, %v939, 0.0
    %958 = vadd.xlane.f32.xlu0 %v957
    %v959 = vpop.xlane.xlu0 %958
    %v960 = vsel %vm158, %v941, 0.0
    %961 = vadd.xlane.f32.xlu0 %v960
    %v962 = vpop.xlane.xlu0 %961
    %v963 = vsel %vm158, %v943, 0.0
    %964 = vadd.xlane.f32.xlu0 %v963
    %v965 = vpop.xlane.xlu0 %964
    %v966 = vsel %vm158, %v945, 0.0
    %967 = vadd.xlane.f32.xlu0 %v966
    %v968 = vpop.xlane.xlu0 %967
    %v969 = vsel %vm158, %v947, 0.0
    %970 = vadd.xlane.f32.xlu0 %v969
    %v971 = vpop.xlane.xlu0 %970
    %v972 = vrcp.pop %v950
    %v973 = vrcp.pop %v953
    %v974 = vrcp.pop %v956
    %v975 = vrcp.pop %v959
    %v976 = vrcp.pop %v962
    %v977 = vrcp.pop %v965
    %v978 = vrcp.pop %v968
    %v979 = vrcp.pop %v971
    %v980 = vmul.f32 %v933, %v972
    %v981 = vmul.f32 %v935, %v973
    %v982 = vmul.f32 %v937, %v974
    %v983 = vmul.f32 %v939, %v975
    %v984 = vmul.f32 %v941, %v976
    %v985 = vmul.f32 %v943, %v977
    %v986 = vmul.f32 %v945, %v978
    %v987 = vmul.f32 %v947, %v979
    %v989 = vsel %vm158, %v980, 0
    %991 = vmatprep.subr.mxu0 0.0
    %992 = vmatpush1.msra.mxu0 %v278
    %993 = vmatprep.subr.mxu0 0.0
    %994 = vmatpush1.msra.mxu0 0.0
    %995 = vmatprep.subr.mxu0 0.0
    %996 = vmatpush1.msra.mxu0 0.0
    %997 = vmatprep.subr.mxu0 0.0
    %998 = vmatpush1.msra.mxu0 0.0
    %999 = vmatprep.subr.mxu0 0.0
    %1000 = vmatpush1.msra.mxu0 0.0
    %1001 = vmatprep.subr.mxu0 0.0
    %1002 = vmatpush1.msra.mxu0 0.0
    %1003 = vmatprep.subr.mxu0 0.0
    %1004 = vmatpush1.msra.mxu0 0.0
    %1005 = vmatprep.subr.mxu0 0.0
    %1006 = vmatpush1.msra.mxu0 0.0
    %1007 = vmatprep.subr.mxu0 0.0
    %1008 = vmatpush1.msra.mxu0 0.0
    %1009 = vmatprep.subr.mxu0 0.0
    %1010 = vmatpush1.msra.mxu0 0.0
    %1011 = vmatprep.subr.mxu0 0.0
    %1012 = vmatpush1.msra.mxu0 0.0
    %1013 = vmatprep.subr.mxu0 0.0
    %1014 = vmatpush1.msra.mxu0 0.0
    %1015 = vmatprep.subr.mxu0 0.0
    %1016 = vmatpush1.msra.mxu0 0.0
    %1017 = vmatprep.subr.mxu0 0.0
    %1018 = vmatpush1.msra.mxu0 0.0
    %1019 = vmatprep.subr.mxu0 0.0
    %1020 = vmatpush1.msra.mxu0 0.0
    %1021 = vmatprep.subr.mxu0 0.0
    %1022 = vmatpush1.msra.mxu0 0.0
    %1023 = vmatprep.subr.mxu0 0.0
    %1024 = vmatpush1.msra.mxu0 0.0
    %1025 = vmatprep.subr.mxu0 0.0
    %1026 = vmatpush1.msra.mxu0 0.0
    %1027 = vmatprep.subr.mxu0 0.0
    %1028 = vmatpush1.msra.mxu0 0.0
    %1029 = vmatprep.subr.mxu0 0.0
    %1030 = vmatpush1.msra.mxu0 0.0
    %1031 = vmatprep.subr.mxu0 0.0
    %1032 = vmatpush1.msra.mxu0 0.0
    %1033 = vmatprep.subr.mxu0 0.0
    %1034 = vmatpush1.msra.mxu0 0.0
    %1035 = vmatprep.subr.mxu0 0.0
    %1036 = vmatpush1.msra.mxu0 0.0
    %1037 = vmatprep.subr.mxu0 0.0
    %1038 = vmatpush1.msra.mxu0 0.0
    %1039 = vmatprep.subr.mxu0 0.0
    %1040 = vmatpush1.msra.mxu0 0.0
    %1041 = vmatprep.subr.mxu0 0.0
    %1042 = vmatpush1.msra.mxu0 0.0
    %1043 = vmatprep.subr.mxu0 0.0
    %1044 = vmatpush1.msra.mxu0 0.0
    %1045 = vmatprep.subr.mxu0 0.0
    %1046 = vmatpush1.msra.mxu0 0.0
    %1047 = vmatprep.subr.mxu0 0.0
    %1048 = vmatpush1.msra.mxu0 0.0
    %1049 = vmatprep.subr.mxu0 0.0
    %1050 = vmatpush1.msra.mxu0 0.0
    %1051 = vmatprep.subr.mxu0 0.0
    %1052 = vmatpush1.msra.mxu0 0.0
    %1053 = vmatprep.subr.mxu0 0.0
    %1054 = vmatpush1.msra.mxu0 0.0
    %1055 = vmatprep.mubr.f32.mxu0 0.0
    %1056 = vmatmul.mubr.f32.gmra.mrb[0].mxu0 %v989
    %v1057 = vpop.f32.mrb[0].mxu0
    %v1058 = vadd.f32 0.0, %v1057
    %v1059 = vpop.f32.mrb[0].mxu0
    %1060 = vdwg.mxu0
    %v1062 = vsel %vm158, %v981, 0
    %1064 = vmatprep.subr.mxu0 0.0
    %1065 = vmatpush1.msra.mxu0 %v279
    %1066 = vmatprep.subr.mxu0 0.0
    %1067 = vmatpush1.msra.mxu0 0.0
    %1068 = vmatprep.subr.mxu0 0.0
    %1069 = vmatpush1.msra.mxu0 0.0
    %1070 = vmatprep.subr.mxu0 0.0
    %1071 = vmatpush1.msra.mxu0 0.0
    %1072 = vmatprep.subr.mxu0 0.0
    %1073 = vmatpush1.msra.mxu0 0.0
    %1074 = vmatprep.subr.mxu0 0.0
    %1075 = vmatpush1.msra.mxu0 0.0
    %1076 = vmatprep.subr.mxu0 0.0
    %1077 = vmatpush1.msra.mxu0 0.0
    %1078 = vmatprep.subr.mxu0 0.0
    %1079 = vmatpush1.msra.mxu0 0.0
    %1080 = vmatprep.subr.mxu0 0.0
    %1081 = vmatpush1.msra.mxu0 0.0
    %1082 = vmatprep.subr.mxu0 0.0
    %1083 = vmatpush1.msra.mxu0 0.0
    %1084 = vmatprep.subr.mxu0 0.0
    %1085 = vmatpush1.msra.mxu0 0.0
    %1086 = vmatprep.subr.mxu0 0.0
    %1087 = vmatpush1.msra.mxu0 0.0
    %1088 = vmatprep.subr.mxu0 0.0
    %1089 = vmatpush1.msra.mxu0 0.0
    %1090 = vmatprep.subr.mxu0 0.0
    %1091 = vmatpush1.msra.mxu0 0.0
    %1092 = vmatprep.subr.mxu0 0.0
    %1093 = vmatpush1.msra.mxu0 0.0
    %1094 = vmatprep.subr.mxu0 0.0
    %1095 = vmatpush1.msra.mxu0 0.0
    %1096 = vmatprep.subr.mxu0 0.0
    %1097 = vmatpush1.msra.mxu0 0.0
    %1098 = vmatprep.subr.mxu0 0.0
    %1099 = vmatpush1.msra.mxu0 0.0
    %1100 = vmatprep.subr.mxu0 0.0
    %1101 = vmatpush1.msra.mxu0 0.0
    %1102 = vmatprep.subr.mxu0 0.0
    %1103 = vmatpush1.msra.mxu0 0.0
    %1104 = vmatprep.subr.mxu0 0.0
    %1105 = vmatpush1.msra.mxu0 0.0
    %1106 = vmatprep.subr.mxu0 0.0
    %1107 = vmatpush1.msra.mxu0 0.0
    %1108 = vmatprep.subr.mxu0 0.0
    %1109 = vmatpush1.msra.mxu0 0.0
    %1110 = vmatprep.subr.mxu0 0.0
    %1111 = vmatpush1.msra.mxu0 0.0
    %1112 = vmatprep.subr.mxu0 0.0
    %1113 = vmatpush1.msra.mxu0 0.0
    %1114 = vmatprep.subr.mxu0 0.0
    %1115 = vmatpush1.msra.mxu0 0.0
    %1116 = vmatprep.subr.mxu0 0.0
    %1117 = vmatpush1.msra.mxu0 0.0
    %1118 = vmatprep.subr.mxu0 0.0
    %1119 = vmatpush1.msra.mxu0 0.0
    %1120 = vmatprep.subr.mxu0 0.0
    %1121 = vmatpush1.msra.mxu0 0.0
    %1122 = vmatprep.subr.mxu0 0.0
    %1123 = vmatpush1.msra.mxu0 0.0
    %1124 = vmatprep.subr.mxu0 0.0
    %1125 = vmatpush1.msra.mxu0 0.0
    %1126 = vmatprep.subr.mxu0 0.0
    %1127 = vmatpush1.msra.mxu0 0.0
    %1128 = vmatprep.mubr.f32.mxu0 0.0
    %1129 = vmatmul.mubr.f32.gmra.mrb[0].mxu0 %v1062
    %v1130 = vpop.f32.mrb[0].mxu0
    %v1131 = vadd.f32 0.0, %v1130
    %v1132 = vpop.f32.mrb[0].mxu0
    %1133 = vdwg.mxu0
    %v1135 = vsel %vm158, %v982, 0
    %1137 = vmatprep.subr.mxu0 0.0
    %1138 = vmatpush1.msra.mxu0 %v280
    %1139 = vmatprep.subr.mxu0 0.0
    %1140 = vmatpush1.msra.mxu0 0.0
    %1141 = vmatprep.subr.mxu0 0.0
    %1142 = vmatpush1.msra.mxu0 0.0
    %1143 = vmatprep.subr.mxu0 0.0
    %1144 = vmatpush1.msra.mxu0 0.0
    %1145 = vmatprep.subr.mxu0 0.0
    %1146 = vmatpush1.msra.mxu0 0.0
    %1147 = vmatprep.subr.mxu0 0.0
    %1148 = vmatpush1.msra.mxu0 0.0
    %1149 = vmatprep.subr.mxu0 0.0
    %1150 = vmatpush1.msra.mxu0 0.0
    %1151 = vmatprep.subr.mxu0 0.0
    %1152 = vmatpush1.msra.mxu0 0.0
    %1153 = vmatprep.subr.mxu0 0.0
    %1154 = vmatpush1.msra.mxu0 0.0
    %1155 = vmatprep.subr.mxu0 0.0
    %1156 = vmatpush1.msra.mxu0 0.0
    %1157 = vmatprep.subr.mxu0 0.0
    %1158 = vmatpush1.msra.mxu0 0.0
    %1159 = vmatprep.subr.mxu0 0.0
    %1160 = vmatpush1.msra.mxu0 0.0
    %1161 = vmatprep.subr.mxu0 0.0
    %1162 = vmatpush1.msra.mxu0 0.0
    %1163 = vmatprep.subr.mxu0 0.0
    %1164 = vmatpush1.msra.mxu0 0.0
    %1165 = vmatprep.subr.mxu0 0.0
    %1166 = vmatpush1.msra.mxu0 0.0
    %1167 = vmatprep.subr.mxu0 0.0
    %1168 = vmatpush1.msra.mxu0 0.0
    %1169 = vmatprep.subr.mxu0 0.0
    %1170 = vmatpush1.msra.mxu0 0.0
    %1171 = vmatprep.subr.mxu0 0.0
    %1172 = vmatpush1.msra.mxu0 0.0
    %1173 = vmatprep.subr.mxu0 0.0
    %1174 = vmatpush1.msra.mxu0 0.0
    %1175 = vmatprep.subr.mxu0 0.0
    %1176 = vmatpush1.msra.mxu0 0.0
    %1177 = vmatprep.subr.mxu0 0.0
    %1178 = vmatpush1.msra.mxu0 0.0
    %1179 = vmatprep.subr.mxu0 0.0
    %1180 = vmatpush1.msra.mxu0 0.0
    %1181 = vmatprep.subr.mxu0 0.0
    %1182 = vmatpush1.msra.mxu0 0.0
    %1183 = vmatprep.subr.mxu0 0.0
    %1184 = vmatpush1.msra.mxu0 0.0
    %1185 = vmatprep.subr.mxu0 0.0
    %1186 = vmatpush1.msra.mxu0 0.0
    %1187 = vmatprep.subr.mxu0 0.0
    %1188 = vmatpush1.msra.mxu0 0.0
    %1189 = vmatprep.subr.mxu0 0.0
    %1190 = vmatpush1.msra.mxu0 0.0
    %1191 = vmatprep.subr.mxu0 0.0
    %1192 = vmatpush1.msra.mxu0 0.0
    %1193 = vmatprep.subr.mxu0 0.0
    %1194 = vmatpush1.msra.mxu0 0.0
    %1195 = vmatprep.subr.mxu0 0.0
    %1196 = vmatpush1.msra.mxu0 0.0
    %1197 = vmatprep.subr.mxu0 0.0
    %1198 = vmatpush1.msra.mxu0 0.0
    %1199 = vmatprep.subr.mxu0 0.0
    %1200 = vmatpush1.msra.mxu0 0.0
    %1201 = vmatprep.mubr.f32.mxu0 0.0
    %1202 = vmatmul.mubr.f32.gmra.mrb[0].mxu0 %v1135
    %v1203 = vpop.f32.mrb[0].mxu0
    %v1204 = vadd.f32 0.0, %v1203
    %v1205 = vpop.f32.mrb[0].mxu0
    %1206 = vdwg.mxu0
    %v1208 = vsel %vm158, %v983, 0
    %1210 = vmatprep.subr.mxu0 0.0
    %1211 = vmatpush1.msra.mxu0 %v281
    %1212 = vmatprep.subr.mxu0 0.0
    %1213 = vmatpush1.msra.mxu0 0.0
    %1214 = vmatprep.subr.mxu0 0.0
    %1215 = vmatpush1.msra.mxu0 0.0
    %1216 = vmatprep.subr.mxu0 0.0
    %1217 = vmatpush1.msra.mxu0 0.0
    %1218 = vmatprep.subr.mxu0 0.0
    %1219 = vmatpush1.msra.mxu0 0.0
    %1220 = vmatprep.subr.mxu0 0.0
    %1221 = vmatpush1.msra.mxu0 0.0
    %1222 = vmatprep.subr.mxu0 0.0
    %1223 = vmatpush1.msra.mxu0 0.0
    %1224 = vmatprep.subr.mxu0 0.0
    %1225 = vmatpush1.msra.mxu0 0.0
    %1226 = vmatprep.subr.mxu0 0.0
    %1227 = vmatpush1.msra.mxu0 0.0
    %1228 = vmatprep.subr.mxu0 0.0
    %1229 = vmatpush1.msra.mxu0 0.0
    %1230 = vmatprep.subr.mxu0 0.0
    %1231 = vmatpush1.msra.mxu0 0.0
    %1232 = vmatprep.subr.mxu0 0.0
    %1233 = vmatpush1.msra.mxu0 0.0
    %1234 = vmatprep.subr.mxu0 0.0
    %1235 = vmatpush1.msra.mxu0 0.0
    %1236 = vmatprep.subr.mxu0 0.0
    %1237 = vmatpush1.msra.mxu0 0.0
    %1238 = vmatprep.subr.mxu0 0.0
    %1239 = vmatpush1.msra.mxu0 0.0
    %1240 = vmatprep.subr.mxu0 0.0
    %1241 = vmatpush1.msra.mxu0 0.0
    %1242 = vmatprep.subr.mxu0 0.0
    %1243 = vmatpush1.msra.mxu0 0.0
    %1244 = vmatprep.subr.mxu0 0.0
    %1245 = vmatpush1.msra.mxu0 0.0
    %1246 = vmatprep.subr.mxu0 0.0
    %1247 = vmatpush1.msra.mxu0 0.0
    %1248 = vmatprep.subr.mxu0 0.0
    %1249 = vmatpush1.msra.mxu0 0.0
    %1250 = vmatprep.subr.mxu0 0.0
    %1251 = vmatpush1.msra.mxu0 0.0
    %1252 = vmatprep.subr.mxu0 0.0
    %1253 = vmatpush1.msra.mxu0 0.0
    %1254 = vmatprep.subr.mxu0 0.0
    %1255 = vmatpush1.msra.mxu0 0.0
    %1256 = vmatprep.subr.mxu0 0.0
    %1257 = vmatpush1.msra.mxu0 0.0
    %1258 = vmatprep.subr.mxu0 0.0
    %1259 = vmatpush1.msra.mxu0 0.0
    %1260 = vmatprep.subr.mxu0 0.0
    %1261 = vmatpush1.msra.mxu0 0.0
    %1262 = vmatprep.subr.mxu0 0.0
    %1263 = vmatpush1.msra.mxu0 0.0
    %1264 = vmatprep.subr.mxu0 0.0
    %1265 = vmatpush1.msra.mxu0 0.0
    %1266 = vmatprep.subr.mxu0 0.0
    %1267 = vmatpush1.msra.mxu0 0.0
    %1268 = vmatprep.subr.mxu0 0.0
    %1269 = vmatpush1.msra.mxu0 0.0
    %1270 = vmatprep.subr.mxu0 0.0
    %1271 = vmatpush1.msra.mxu0 0.0
    %1272 = vmatprep.subr.mxu0 0.0
    %1273 = vmatpush1.msra.mxu0 0.0
    %1274 = vmatprep.mubr.f32.mxu0 0.0
    %1275 = vmatmul.mubr.f32.gmra.mrb[0].mxu0 %v1208
    %v1276 = vpop.f32.mrb[0].mxu0
    %v1277 = vadd.f32 0.0, %v1276
    %v1278 = vpop.f32.mrb[0].mxu0
    %1279 = vdwg.mxu0
    %v1281 = vsel %vm158, %v984, 0
    %1283 = vmatprep.subr.mxu0 0.0
    %1284 = vmatpush1.msra.mxu0 %v282
    %1285 = vmatprep.subr.mxu0 0.0
    %1286 = vmatpush1.msra.mxu0 0.0
    %1287 = vmatprep.subr.mxu0 0.0
    %1288 = vmatpush1.msra.mxu0 0.0
    %1289 = vmatprep.subr.mxu0 0.0
    %1290 = vmatpush1.msra.mxu0 0.0
    %1291 = vmatprep.subr.mxu0 0.0
    %1292 = vmatpush1.msra.mxu0 0.0
    %1293 = vmatprep.subr.mxu0 0.0
    %1294 = vmatpush1.msra.mxu0 0.0
    %1295 = vmatprep.subr.mxu0 0.0
    %1296 = vmatpush1.msra.mxu0 0.0
    %1297 = vmatprep.subr.mxu0 0.0
    %1298 = vmatpush1.msra.mxu0 0.0
    %1299 = vmatprep.subr.mxu0 0.0
    %1300 = vmatpush1.msra.mxu0 0.0
    %1301 = vmatprep.subr.mxu0 0.0
    %1302 = vmatpush1.msra.mxu0 0.0
    %1303 = vmatprep.subr.mxu0 0.0
    %1304 = vmatpush1.msra.mxu0 0.0
    %1305 = vmatprep.subr.mxu0 0.0
    %1306 = vmatpush1.msra.mxu0 0.0
    %1307 = vmatprep.subr.mxu0 0.0
    %1308 = vmatpush1.msra.mxu0 0.0
    %1309 = vmatprep.subr.mxu0 0.0
    %1310 = vmatpush1.msra.mxu0 0.0
    %1311 = vmatprep.subr.mxu0 0.0
    %1312 = vmatpush1.msra.mxu0 0.0
    %1313 = vmatprep.subr.mxu0 0.0
    %1314 = vmatpush1.msra.mxu0 0.0
    %1315 = vmatprep.subr.mxu0 0.0
    %1316 = vmatpush1.msra.mxu0 0.0
    %1317 = vmatprep.subr.mxu0 0.0
    %1318 = vmatpush1.msra.mxu0 0.0
    %1319 = vmatprep.subr.mxu0 0.0
    %1320 = vmatpush1.msra.mxu0 0.0
    %1321 = vmatprep.subr.mxu0 0.0
    %1322 = vmatpush1.msra.mxu0 0.0
    %1323 = vmatprep.subr.mxu0 0.0
    %1324 = vmatpush1.msra.mxu0 0.0
    %1325 = vmatprep.subr.mxu0 0.0
    %1326 = vmatpush1.msra.mxu0 0.0
    %1327 = vmatprep.subr.mxu0 0.0
    %1328 = vmatpush1.msra.mxu0 0.0
    %1329 = vmatprep.subr.mxu0 0.0
    %1330 = vmatpush1.msra.mxu0 0.0
    %1331 = vmatprep.subr.mxu0 0.0
    %1332 = vmatpush1.msra.mxu0 0.0
    %1333 = vmatprep.subr.mxu0 0.0
    %1334 = vmatpush1.msra.mxu0 0.0
    %1335 = vmatprep.subr.mxu0 0.0
    %1336 = vmatpush1.msra.mxu0 0.0
    %1337 = vmatprep.subr.mxu0 0.0
    %1338 = vmatpush1.msra.mxu0 0.0
    %1339 = vmatprep.subr.mxu0 0.0
    %1340 = vmatpush1.msra.mxu0 0.0
    %1341 = vmatprep.subr.mxu0 0.0
    %1342 = vmatpush1.msra.mxu0 0.0
    %1343 = vmatprep.subr.mxu0 0.0
    %1344 = vmatpush1.msra.mxu0 0.0
    %1345 = vmatprep.subr.mxu0 0.0
    %1346 = vmatpush1.msra.mxu0 0.0
    %1347 = vmatprep.mubr.f32.mxu0 0.0
    %1348 = vmatmul.mubr.f32.gmra.mrb[0].mxu0 %v1281
    %v1349 = vpop.f32.mrb[0].mxu0
    %v1350 = vadd.f32 0.0, %v1349
    %v1351 = vpop.f32.mrb[0].mxu0
    %1352 = vdwg.mxu0
    %v1354 = vsel %vm158, %v985, 0
    %1356 = vmatprep.subr.mxu0 0.0
    %1357 = vmatpush1.msra.mxu0 %v283
    %1358 = vmatprep.subr.mxu0 0.0
    %1359 = vmatpush1.msra.mxu0 0.0
    %1360 = vmatprep.subr.mxu0 0.0
    %1361 = vmatpush1.msra.mxu0 0.0
    %1362 = vmatprep.subr.mxu0 0.0
    %1363 = vmatpush1.msra.mxu0 0.0
    %1364 = vmatprep.subr.mxu0 0.0
    %1365 = vmatpush1.msra.mxu0 0.0
    %1366 = vmatprep.subr.mxu0 0.0
    %1367 = vmatpush1.msra.mxu0 0.0
    %1368 = vmatprep.subr.mxu0 0.0
    %1369 = vmatpush1.msra.mxu0 0.0
    %1370 = vmatprep.subr.mxu0 0.0
    %1371 = vmatpush1.msra.mxu0 0.0
    %1372 = vmatprep.subr.mxu0 0.0
    %1373 = vmatpush1.msra.mxu0 0.0
    %1374 = vmatprep.subr.mxu0 0.0
    %1375 = vmatpush1.msra.mxu0 0.0
    %1376 = vmatprep.subr.mxu0 0.0
    %1377 = vmatpush1.msra.mxu0 0.0
    %1378 = vmatprep.subr.mxu0 0.0
    %1379 = vmatpush1.msra.mxu0 0.0
    %1380 = vmatprep.subr.mxu0 0.0
    %1381 = vmatpush1.msra.mxu0 0.0
    %1382 = vmatprep.subr.mxu0 0.0
    %1383 = vmatpush1.msra.mxu0 0.0
    %1384 = vmatprep.subr.mxu0 0.0
    %1385 = vmatpush1.msra.mxu0 0.0
    %1386 = vmatprep.subr.mxu0 0.0
    %1387 = vmatpush1.msra.mxu0 0.0
    %1388 = vmatprep.subr.mxu0 0.0
    %1389 = vmatpush1.msra.mxu0 0.0
    %1390 = vmatprep.subr.mxu0 0.0
    %1391 = vmatpush1.msra.mxu0 0.0
    %1392 = vmatprep.subr.mxu0 0.0
    %1393 = vmatpush1.msra.mxu0 0.0
    %1394 = vmatprep.subr.mxu0 0.0
    %1395 = vmatpush1.msra.mxu0 0.0
    %1396 = vmatprep.subr.mxu0 0.0
    %1397 = vmatpush1.msra.mxu0 0.0
    %1398 = vmatprep.subr.mxu0 0.0
    %1399 = vmatpush1.msra.mxu0 0.0
    %1400 = vmatprep.subr.mxu0 0.0
    %1401 = vmatpush1.msra.mxu0 0.0
    %1402 = vmatprep.subr.mxu0 0.0
    %1403 = vmatpush1.msra.mxu0 0.0
    %1404 = vmatprep.subr.mxu0 0.0
    %1405 = vmatpush1.msra.mxu0 0.0
    %1406 = vmatprep.subr.mxu0 0.0
    %1407 = vmatpush1.msra.mxu0 0.0
    %1408 = vmatprep.subr.mxu0 0.0
    %1409 = vmatpush1.msra.mxu0 0.0
    %1410 = vmatprep.subr.mxu0 0.0
    %1411 = vmatpush1.msra.mxu0 0.0
    %1412 = vmatprep.subr.mxu0 0.0
    %1413 = vmatpush1.msra.mxu0 0.0
    %1414 = vmatprep.subr.mxu0 0.0
    %1415 = vmatpush1.msra.mxu0 0.0
    %1416 = vmatprep.subr.mxu0 0.0
    %1417 = vmatpush1.msra.mxu0 0.0
    %1418 = vmatprep.subr.mxu0 0.0
    %1419 = vmatpush1.msra.mxu0 0.0
    %1420 = vmatprep.mubr.f32.mxu0 0.0
    %1421 = vmatmul.mubr.f32.gmra.mrb[0].mxu0 %v1354
    %v1422 = vpop.f32.mrb[0].mxu0
    %v1423 = vadd.f32 0.0, %v1422
    %v1424 = vpop.f32.mrb[0].mxu0
    %1425 = vdwg.mxu0
    %v1427 = vsel %vm158, %v986, 0
    %1429 = vmatprep.subr.mxu0 0.0
    %1430 = vmatpush1.msra.mxu0 %v284
    %1431 = vmatprep.subr.mxu0 0.0
    %1432 = vmatpush1.msra.mxu0 0.0
    %1433 = vmatprep.subr.mxu0 0.0
    %1434 = vmatpush1.msra.mxu0 0.0
    %1435 = vmatprep.subr.mxu0 0.0
    %1436 = vmatpush1.msra.mxu0 0.0
    %1437 = vmatprep.subr.mxu0 0.0
    %1438 = vmatpush1.msra.mxu0 0.0
    %1439 = vmatprep.subr.mxu0 0.0
    %1440 = vmatpush1.msra.mxu0 0.0
    %1441 = vmatprep.subr.mxu0 0.0
    %1442 = vmatpush1.msra.mxu0 0.0
    %1443 = vmatprep.subr.mxu0 0.0
    %1444 = vmatpush1.msra.mxu0 0.0
    %1445 = vmatprep.subr.mxu0 0.0
    %1446 = vmatpush1.msra.mxu0 0.0
    %1447 = vmatprep.subr.mxu0 0.0
    %1448 = vmatpush1.msra.mxu0 0.0
    %1449 = vmatprep.subr.mxu0 0.0
    %1450 = vmatpush1.msra.mxu0 0.0
    %1451 = vmatprep.subr.mxu0 0.0
    %1452 = vmatpush1.msra.mxu0 0.0
    %1453 = vmatprep.subr.mxu0 0.0
    %1454 = vmatpush1.msra.mxu0 0.0
    %1455 = vmatprep.subr.mxu0 0.0
    %1456 = vmatpush1.msra.mxu0 0.0
    %1457 = vmatprep.subr.mxu0 0.0
    %1458 = vmatpush1.msra.mxu0 0.0
    %1459 = vmatprep.subr.mxu0 0.0
    %1460 = vmatpush1.msra.mxu0 0.0
    %1461 = vmatprep.subr.mxu0 0.0
    %1462 = vmatpush1.msra.mxu0 0.0
    %1463 = vmatprep.subr.mxu0 0.0
    %1464 = vmatpush1.msra.mxu0 0.0
    %1465 = vmatprep.subr.mxu0 0.0
    %1466 = vmatpush1.msra.mxu0 0.0
    %1467 = vmatprep.subr.mxu0 0.0
    %1468 = vmatpush1.msra.mxu0 0.0
    %1469 = vmatprep.subr.mxu0 0.0
    %1470 = vmatpush1.msra.mxu0 0.0
    %1471 = vmatprep.subr.mxu0 0.0
    %1472 = vmatpush1.msra.mxu0 0.0
    %1473 = vmatprep.subr.mxu0 0.0
    %1474 = vmatpush1.msra.mxu0 0.0
    %1475 = vmatprep.subr.mxu0 0.0
    %1476 = vmatpush1.msra.mxu0 0.0
    %1477 = vmatprep.subr.mxu0 0.0
    %1478 = vmatpush1.msra.mxu0 0.0
    %1479 = vmatprep.subr.mxu0 0.0
    %1480 = vmatpush1.msra.mxu0 0.0
    %1481 = vmatprep.subr.mxu0 0.0
    %1482 = vmatpush1.msra.mxu0 0.0
    %1483 = vmatprep.subr.mxu0 0.0
    %1484 = vmatpush1.msra.mxu0 0.0
    %1485 = vmatprep.subr.mxu0 0.0
    %1486 = vmatpush1.msra.mxu0 0.0
    %1487 = vmatprep.subr.mxu0 0.0
    %1488 = vmatpush1.msra.mxu0 0.0
    %1489 = vmatprep.subr.mxu0 0.0
    %1490 = vmatpush1.msra.mxu0 0.0
    %1491 = vmatprep.subr.mxu0 0.0
    %1492 = vmatpush1.msra.mxu0 0.0
    %1493 = vmatprep.mubr.f32.mxu0 0.0
    %1494 = vmatmul.mubr.f32.gmra.mrb[0].mxu0 %v1427
    %v1495 = vpop.f32.mrb[0].mxu0
    %v1496 = vadd.f32 0.0, %v1495
    %v1497 = vpop.f32.mrb[0].mxu0
    %1498 = vdwg.mxu0
    %v1500 = vsel %vm158, %v987, 0
    %1502 = vmatprep.subr.mxu0 0.0
    %1503 = vmatpush1.msra.mxu0 %v285
    %1504 = vmatprep.subr.mxu0 0.0
    %1505 = vmatpush1.msra.mxu0 0.0
    %1506 = vmatprep.subr.mxu0 0.0
    %1507 = vmatpush1.msra.mxu0 0.0
    %1508 = vmatprep.subr.mxu0 0.0
    %1509 = vmatpush1.msra.mxu0 0.0
    %1510 = vmatprep.subr.mxu0 0.0
    %1511 = vmatpush1.msra.mxu0 0.0
    %1512 = vmatprep.subr.mxu0 0.0
    %1513 = vmatpush1.msra.mxu0 0.0
    %1514 = vmatprep.subr.mxu0 0.0
    %1515 = vmatpush1.msra.mxu0 0.0
    %1516 = vmatprep.subr.mxu0 0.0
    %1517 = vmatpush1.msra.mxu0 0.0
    %1518 = vmatprep.subr.mxu0 0.0
    %1519 = vmatpush1.msra.mxu0 0.0
    %1520 = vmatprep.subr.mxu0 0.0
    %1521 = vmatpush1.msra.mxu0 0.0
    %1522 = vmatprep.subr.mxu0 0.0
    %1523 = vmatpush1.msra.mxu0 0.0
    %1524 = vmatprep.subr.mxu0 0.0
    %1525 = vmatpush1.msra.mxu0 0.0
    %1526 = vmatprep.subr.mxu0 0.0
    %1527 = vmatpush1.msra.mxu0 0.0
    %1528 = vmatprep.subr.mxu0 0.0
    %1529 = vmatpush1.msra.mxu0 0.0
    %1530 = vmatprep.subr.mxu0 0.0
    %1531 = vmatpush1.msra.mxu0 0.0
    %1532 = vmatprep.subr.mxu0 0.0
    %1533 = vmatpush1.msra.mxu0 0.0
    %1534 = vmatprep.subr.mxu0 0.0
    %1535 = vmatpush1.msra.mxu0 0.0
    %1536 = vmatprep.subr.mxu0 0.0
    %1537 = vmatpush1.msra.mxu0 0.0
    %1538 = vmatprep.subr.mxu0 0.0
    %1539 = vmatpush1.msra.mxu0 0.0
    %1540 = vmatprep.subr.mxu0 0.0
    %1541 = vmatpush1.msra.mxu0 0.0
    %1542 = vmatprep.subr.mxu0 0.0
    %1543 = vmatpush1.msra.mxu0 0.0
    %1544 = vmatprep.subr.mxu0 0.0
    %1545 = vmatpush1.msra.mxu0 0.0
    %1546 = vmatprep.subr.mxu0 0.0
    %1547 = vmatpush1.msra.mxu0 0.0
    %1548 = vmatprep.subr.mxu0 0.0
    %1549 = vmatpush1.msra.mxu0 0.0
    %1550 = vmatprep.subr.mxu0 0.0
    %1551 = vmatpush1.msra.mxu0 0.0
    %1552 = vmatprep.subr.mxu0 0.0
    %1553 = vmatpush1.msra.mxu0 0.0
    %1554 = vmatprep.subr.mxu0 0.0
    %1555 = vmatpush1.msra.mxu0 0.0
    %1556 = vmatprep.subr.mxu0 0.0
    %1557 = vmatpush1.msra.mxu0 0.0
    %1558 = vmatprep.subr.mxu0 0.0
    %1559 = vmatpush1.msra.mxu0 0.0
    %1560 = vmatprep.subr.mxu0 0.0
    %1561 = vmatpush1.msra.mxu0 0.0
    %1562 = vmatprep.subr.mxu0 0.0
    %1563 = vmatpush1.msra.mxu0 0.0
    %1564 = vmatprep.subr.mxu0 0.0
    %1565 = vmatpush1.msra.mxu0 0.0
    %1566 = vmatprep.mubr.f32.mxu0 0.0
    %1567 = vmatmul.mubr.f32.gmra.mrb[0].mxu0 %v1500
    %v1568 = vpop.f32.mrb[0].mxu0
    %v1569 = vadd.f32 0.0, %v1568
    %v1570 = vpop.f32.mrb[0].mxu0
    %1571 = vdwg.mxu0
    %v1572 = vld [vmem:[%s3] sm:$0xff]
    %v1573 = vld [vmem:[%s3 + $0x8] sm:$0xff]
    %v1574 = vld [vmem:[%s3 + $0x10] sm:$0xff]
    %v1575 = vld [vmem:[%s3 + $0x18] sm:$0xff]
    %v1577 = vsel %vm158, %v1204, 0
    %v1580 = vsel %vm158, %v1277, 0
    %1582 = vmatprep.subr.mxu0 0.0
    %1583 = vmatpush1.msra.mxu0 %v1573
    %1584 = vmatprep.subr.mxu0 0.0
    %1585 = vmatpush1.msra.mxu0 0.0
    %1586 = vmatprep.subr.mxu0 0.0
    %1587 = vmatpush1.msra.mxu0 0.0
    %1588 = vmatprep.subr.mxu0 0.0
    %1589 = vmatpush1.msra.mxu0 0.0
    %1590 = vmatprep.subr.mxu0 0.0
    %1591 = vmatpush1.msra.mxu0 0.0
    %1592 = vmatprep.subr.mxu0 0.0
    %1593 = vmatpush1.msra.mxu0 0.0
    %1594 = vmatprep.subr.mxu0 0.0
    %1595 = vmatpush1.msra.mxu0 0.0
    %1596 = vmatprep.subr.mxu0 0.0
    %1597 = vmatpush1.msra.mxu0 0.0
    %1598 = vmatprep.subr.mxu0 0.0
    %1599 = vmatpush1.msra.mxu0 0.0
    %1600 = vmatprep.subr.mxu0 0.0
    %1601 = vmatpush1.msra.mxu0 0.0
    %1602 = vmatprep.subr.mxu0 0.0
    %1603 = vmatpush1.msra.mxu0 0.0
    %1604 = vmatprep.subr.mxu0 0.0
    %1605 = vmatpush1.msra.mxu0 0.0
    %1606 = vmatprep.subr.mxu0 0.0
    %1607 = vmatpush1.msra.mxu0 0.0
    %1608 = vmatprep.subr.mxu0 0.0
    %1609 = vmatpush1.msra.mxu0 0.0
    %1610 = vmatprep.subr.mxu0 0.0
    %1611 = vmatpush1.msra.mxu0 0.0
    %1612 = vmatprep.subr.mxu0 0.0
    %1613 = vmatpush1.msra.mxu0 0.0
    %1614 = vmatprep.subr.mxu0 0.0
    %1615 = vmatpush1.msra.mxu0 0.0
    %1616 = vmatprep.subr.mxu0 0.0
    %1617 = vmatpush1.msra.mxu0 0.0
    %1618 = vmatprep.subr.mxu0 0.0
    %1619 = vmatpush1.msra.mxu0 0.0
    %1620 = vmatprep.subr.mxu0 0.0
    %1621 = vmatpush1.msra.mxu0 0.0
    %1622 = vmatprep.subr.mxu0 0.0
    %1623 = vmatpush1.msra.mxu0 0.0
    %1624 = vmatprep.subr.mxu0 0.0
    %1625 = vmatpush1.msra.mxu0 0.0
    %1626 = vmatprep.subr.mxu0 0.0
    %1627 = vmatpush1.msra.mxu0 0.0
    %1628 = vmatprep.subr.mxu0 0.0
    %1629 = vmatpush1.msra.mxu0 0.0
    %1630 = vmatprep.subr.mxu0 0.0
    %1631 = vmatpush1.msra.mxu0 0.0
    %1632 = vmatprep.subr.mxu0 0.0
    %1633 = vmatpush1.msra.mxu0 0.0
    %1634 = vmatprep.subr.mxu0 0.0
    %1635 = vmatpush1.msra.mxu0 0.0
    %1636 = vmatprep.subr.mxu0 0.0
    %1637 = vmatpush1.msra.mxu0 0.0
    %1638 = vmatprep.subr.mxu0 0.0
    %1639 = vmatpush1.msra.mxu0 0.0
    %1640 = vmatprep.subr.mxu0 0.0
    %1641 = vmatpush1.msra.mxu0 0.0
    %1642 = vmatprep.subr.mxu0 0.0
    %1643 = vmatpush1.msra.mxu0 0.0
    %1644 = vmatprep.subr.mxu0 0.0
    %1645 = vmatpush1.msra.mxu0 0.0
    %1646 = vmatprep.mubr.f32.mxu0 0.0
    %1647 = vmatmul.mubr.f32.gmra.mrb[0].mxu0 %v1577
    %v1648 = vpop.f32.mrb[0].mxu0
    %v1649 = vadd.f32 0.0, %v1648
    %v1650 = vpop.f32.mrb[0].mxu0
    %1651 = vmatprep.mubr.f32.mxu0 0.0
    %1652 = vmatmul.mubr.f32.gmra.mrb[0].mxu0 %v1580
    %v1653 = vpop.f32.mrb[0].mxu0
    %v1654 = vadd.f32 0.0, %v1653
    %v1655 = vpop.f32.mrb[0].mxu0
    %1656 = vdwg.mxu0
    %v1658 = vsel %vm158, %v1058, 0
    %v1661 = vsel %vm158, %v1131, 0
    %1663 = vmatprep.subr.mxu0 0.0
    %1664 = vmatpush1.msra.mxu0 %v1572
    %1665 = vmatprep.subr.mxu0 0.0
    %1666 = vmatpush1.msra.mxu0 0.0
    %1667 = vmatprep.subr.mxu0 0.0
    %1668 = vmatpush1.msra.mxu0 0.0
    %1669 = vmatprep.subr.mxu0 0.0
    %1670 = vmatpush1.msra.mxu0 0.0
    %1671 = vmatprep.subr.mxu0 0.0
    %1672 = vmatpush1.msra.mxu0 0.0
    %1673 = vmatprep.subr.mxu0 0.0
    %1674 = vmatpush1.msra.mxu0 0.0
    %1675 = vmatprep.subr.mxu0 0.0
    %1676 = vmatpush1.msra.mxu0 0.0
    %1677 = vmatprep.subr.mxu0 0.0
    %1678 = vmatpush1.msra.mxu0 0.0
    %1679 = vmatprep.subr.mxu0 0.0
    %1680 = vmatpush1.msra.mxu0 0.0
    %1681 = vmatprep.subr.mxu0 0.0
    %1682 = vmatpush1.msra.mxu0 0.0
    %1683 = vmatprep.subr.mxu0 0.0
    %1684 = vmatpush1.msra.mxu0 0.0
    %1685 = vmatprep.subr.mxu0 0.0
    %1686 = vmatpush1.msra.mxu0 0.0
    %1687 = vmatprep.subr.mxu0 0.0
    %1688 = vmatpush1.msra.mxu0 0.0
    %1689 = vmatprep.subr.mxu0 0.0
    %1690 = vmatpush1.msra.mxu0 0.0
    %1691 = vmatprep.subr.mxu0 0.0
    %1692 = vmatpush1.msra.mxu0 0.0
    %1693 = vmatprep.subr.mxu0 0.0
    %1694 = vmatpush1.msra.mxu0 0.0
    %1695 = vmatprep.subr.mxu0 0.0
    %1696 = vmatpush1.msra.mxu0 0.0
    %1697 = vmatprep.subr.mxu0 0.0
    %1698 = vmatpush1.msra.mxu0 0.0
    %1699 = vmatprep.subr.mxu0 0.0
    %1700 = vmatpush1.msra.mxu0 0.0
    %1701 = vmatprep.subr.mxu0 0.0
    %1702 = vmatpush1.msra.mxu0 0.0
    %1703 = vmatprep.subr.mxu0 0.0
    %1704 = vmatpush1.msra.mxu0 0.0
    %1705 = vmatprep.subr.mxu0 0.0
    %1706 = vmatpush1.msra.mxu0 0.0
    %1707 = vmatprep.subr.mxu0 0.0
    %1708 = vmatpush1.msra.mxu0 0.0
    %1709 = vmatprep.subr.mxu0 0.0
    %1710 = vmatpush1.msra.mxu0 0.0
    %1711 = vmatprep.subr.mxu0 0.0
    %1712 = vmatpush1.msra.mxu0 0.0
    %1713 = vmatprep.subr.mxu0 0.0
    %1714 = vmatpush1.msra.mxu0 0.0
    %1715 = vmatprep.subr.mxu0 0.0
    %1716 = vmatpush1.msra.mxu0 0.0
    %1717 = vmatprep.subr.mxu0 0.0
    %1718 = vmatpush1.msra.mxu0 0.0
    %1719 = vmatprep.subr.mxu0 0.0
    %1720 = vmatpush1.msra.mxu0 0.0
    %1721 = vmatprep.subr.mxu0 0.0
    %1722 = vmatpush1.msra.mxu0 0.0
    %1723 = vmatprep.subr.mxu0 0.0
    %1724 = vmatpush1.msra.mxu0 0.0
    %1725 = vmatprep.subr.mxu0 0.0
    %1726 = vmatpush1.msra.mxu0 0.0
    %1727 = vmatprep.mubr.f32.mxu0 0.0
    %1728 = vmatmul.mubr.f32.gmra.mrb[0].mxu0 %v1658
    %v1729 = vpop.f32.mrb[0].mxu0
    %v1730 = vadd.f32 %v1649, %v1729
    %v1731 = vpop.f32.mrb[0].mxu0
    %1732 = vmatprep.mubr.f32.mxu0 0.0
    %1733 = vmatmul.mubr.f32.gmra.mrb[0].mxu0 %v1661
    %v1734 = vpop.f32.mrb[0].mxu0
    %v1735 = vadd.f32 %v1654, %v1734
    %v1736 = vpop.f32.mrb[0].mxu0
    %1737 = vdwg.mxu0
    %v1739 = vsel %vm158, %v1350, 0
    %v1742 = vsel %vm158, %v1423, 0
    %1744 = vmatprep.subr.mxu0 0.0
    %1745 = vmatpush1.msra.mxu0 %v1574
    %1746 = vmatprep.subr.mxu0 0.0
    %1747 = vmatpush1.msra.mxu0 0.0
    %1748 = vmatprep.subr.mxu0 0.0
    %1749 = vmatpush1.msra.mxu0 0.0
    %1750 = vmatprep.subr.mxu0 0.0
    %1751 = vmatpush1.msra.mxu0 0.0
    %1752 = vmatprep.subr.mxu0 0.0
    %1753 = vmatpush1.msra.mxu0 0.0
    %1754 = vmatprep.subr.mxu0 0.0
    %1755 = vmatpush1.msra.mxu0 0.0
    %1756 = vmatprep.subr.mxu0 0.0
    %1757 = vmatpush1.msra.mxu0 0.0
    %1758 = vmatprep.subr.mxu0 0.0
    %1759 = vmatpush1.msra.mxu0 0.0
    %1760 = vmatprep.subr.mxu0 0.0
    %1761 = vmatpush1.msra.mxu0 0.0
    %1762 = vmatprep.subr.mxu0 0.0
    %1763 = vmatpush1.msra.mxu0 0.0
    %1764 = vmatprep.subr.mxu0 0.0
    %1765 = vmatpush1.msra.mxu0 0.0
    %1766 = vmatprep.subr.mxu0 0.0
    %1767 = vmatpush1.msra.mxu0 0.0
    %1768 = vmatprep.subr.mxu0 0.0
    %1769 = vmatpush1.msra.mxu0 0.0
    %1770 = vmatprep.subr.mxu0 0.0
    %1771 = vmatpush1.msra.mxu0 0.0
    %1772 = vmatprep.subr.mxu0 0.0
    %1773 = vmatpush1.msra.mxu0 0.0
    %1774 = vmatprep.subr.mxu0 0.0
    %1775 = vmatpush1.msra.mxu0 0.0
    %1776 = vmatprep.subr.mxu0 0.0
    %1777 = vmatpush1.msra.mxu0 0.0
    %1778 = vmatprep.subr.mxu0 0.0
    %1779 = vmatpush1.msra.mxu0 0.0
    %1780 = vmatprep.subr.mxu0 0.0
    %1781 = vmatpush1.msra.mxu0 0.0
    %1782 = vmatprep.subr.mxu0 0.0
    %1783 = vmatpush1.msra.mxu0 0.0
    %1784 = vmatprep.subr.mxu0 0.0
    %1785 = vmatpush1.msra.mxu0 0.0
    %1786 = vmatprep.subr.mxu0 0.0
    %1787 = vmatpush1.msra.mxu0 0.0
    %1788 = vmatprep.subr.mxu0 0.0
    %1789 = vmatpush1.msra.mxu0 0.0
    %1790 = vmatprep.subr.mxu0 0.0
    %1791 = vmatpush1.msra.mxu0 0.0
    %1792 = vmatprep.subr.mxu0 0.0
    %1793 = vmatpush1.msra.mxu0 0.0
    %1794 = vmatprep.subr.mxu0 0.0
    %1795 = vmatpush1.msra.mxu0 0.0
    %1796 = vmatprep.subr.mxu0 0.0
    %1797 = vmatpush1.msra.mxu0 0.0
    %1798 = vmatprep.subr.mxu0 0.0
    %1799 = vmatpush1.msra.mxu0 0.0
    %1800 = vmatprep.subr.mxu0 0.0
    %1801 = vmatpush1.msra.mxu0 0.0
    %1802 = vmatprep.subr.mxu0 0.0
    %1803 = vmatpush1.msra.mxu0 0.0
    %1804 = vmatprep.subr.mxu0 0.0
    %1805 = vmatpush1.msra.mxu0 0.0
    %1806 = vmatprep.subr.mxu0 0.0
    %1807 = vmatpush1.msra.mxu0 0.0
    %1808 = vmatprep.mubr.f32.mxu0 0.0
    %1809 = vmatmul.mubr.f32.gmra.mrb[0].mxu0 %v1739
    %v1810 = vpop.f32.mrb[0].mxu0
    %v1811 = vadd.f32 0.0, %v1810
    %v1812 = vpop.f32.mrb[0].mxu0
    %1813 = vmatprep.mubr.f32.mxu0 0.0
    %1814 = vmatmul.mubr.f32.gmra.mrb[0].mxu0 %v1742
    %v1815 = vpop.f32.mrb[0].mxu0
    %v1816 = vadd.f32 0.0, %v1815
    %v1817 = vpop.f32.mrb[0].mxu0
    %1818 = vdwg.mxu0
    %v1819 = vadd.f32 %v1730, %v1811
    %v1820 = vadd.f32 %v1735, %v1816
    %v1822 = vsel %vm158, %v1496, 0
    %v1825 = vsel %vm158, %v1569, 0
    %1827 = vmatprep.subr.mxu0 0.0
    %1828 = vmatpush1.msra.mxu0 %v1575
    %1829 = vmatprep.subr.mxu0 0.0
    %1830 = vmatpush1.msra.mxu0 0.0
    %1831 = vmatprep.subr.mxu0 0.0
    %1832 = vmatpush1.msra.mxu0 0.0
    %1833 = vmatprep.subr.mxu0 0.0
    %1834 = vmatpush1.msra.mxu0 0.0
    %1835 = vmatprep.subr.mxu0 0.0
    %1836 = vmatpush1.msra.mxu0 0.0
    %1837 = vmatprep.subr.mxu0 0.0
    %1838 = vmatpush1.msra.mxu0 0.0
    %1839 = vmatprep.subr.mxu0 0.0
    %1840 = vmatpush1.msra.mxu0 0.0
    %1841 = vmatprep.subr.mxu0 0.0
    %1842 = vmatpush1.msra.mxu0 0.0
    %1843 = vmatprep.subr.mxu0 0.0
    %1844 = vmatpush1.msra.mxu0 0.0
    %1845 = vmatprep.subr.mxu0 0.0
    %1846 = vmatpush1.msra.mxu0 0.0
    %1847 = vmatprep.subr.mxu0 0.0
    %1848 = vmatpush1.msra.mxu0 0.0
    %1849 = vmatprep.subr.mxu0 0.0
    %1850 = vmatpush1.msra.mxu0 0.0
    %1851 = vmatprep.subr.mxu0 0.0
    %1852 = vmatpush1.msra.mxu0 0.0
    %1853 = vmatprep.subr.mxu0 0.0
    %1854 = vmatpush1.msra.mxu0 0.0
    %1855 = vmatprep.subr.mxu0 0.0
    %1856 = vmatpush1.msra.mxu0 0.0
    %1857 = vmatprep.subr.mxu0 0.0
    %1858 = vmatpush1.msra.mxu0 0.0
    %1859 = vmatprep.subr.mxu0 0.0
    %1860 = vmatpush1.msra.mxu0 0.0
    %1861 = vmatprep.subr.mxu0 0.0
    %1862 = vmatpush1.msra.mxu0 0.0
    %1863 = vmatprep.subr.mxu0 0.0
    %1864 = vmatpush1.msra.mxu0 0.0
    %1865 = vmatprep.subr.mxu0 0.0
    %1866 = vmatpush1.msra.mxu0 0.0
    %1867 = vmatprep.subr.mxu0 0.0
    %1868 = vmatpush1.msra.mxu0 0.0
    %1869 = vmatprep.subr.mxu0 0.0
    %1870 = vmatpush1.msra.mxu0 0.0
    %1871 = vmatprep.subr.mxu0 0.0
    %1872 = vmatpush1.msra.mxu0 0.0
    %1873 = vmatprep.subr.mxu0 0.0
    %1874 = vmatpush1.msra.mxu0 0.0
    %1875 = vmatprep.subr.mxu0 0.0
    %1876 = vmatpush1.msra.mxu0 0.0
    %1877 = vmatprep.subr.mxu0 0.0
    %1878 = vmatpush1.msra.mxu0 0.0
    %1879 = vmatprep.subr.mxu0 0.0
    %1880 = vmatpush1.msra.mxu0 0.0
    %1881 = vmatprep.subr.mxu0 0.0
    %1882 = vmatpush1.msra.mxu0 0.0
    %1883 = vmatprep.subr.mxu0 0.0
    %1884 = vmatpush1.msra.mxu0 0.0
    %1885 = vmatprep.subr.mxu0 0.0
    %1886 = vmatpush1.msra.mxu0 0.0
    %1887 = vmatprep.subr.mxu0 0.0
    %1888 = vmatpush1.msra.mxu0 0.0
    %1889 = vmatprep.subr.mxu0 0.0
    %1890 = vmatpush1.msra.mxu0 0.0
    %1891 = vmatprep.mubr.f32.mxu0 0.0
    %1892 = vmatmul.mubr.f32.gmra.mrb[0].mxu0 %v1822
    %v1893 = vpop.f32.mrb[0].mxu0
    %v1894 = vadd.f32 0.0, %v1893
    %v1895 = vpop.f32.mrb[0].mxu0
    %1896 = vmatprep.mubr.f32.mxu0 0.0
    %1897 = vmatmul.mubr.f32.gmra.mrb[0].mxu0 %v1825
    %v1898 = vpop.f32.mrb[0].mxu0
    %v1899 = vadd.f32 0.0, %v1898
    %v1900 = vpop.f32.mrb[0].mxu0
    %1901 = vdwg.mxu0
    %v1902 = vadd.f32 %v1819, %v1894
    %v1903 = vadd.f32 %v1820, %v1899
    %v1904 = vadd.f32 %v24, %v1902
    %v1905 = vadd.f32 %v25, %v1903
    %v1906 = vlaneseq
    %v1907 = vshrl.u32 %v1906, 7
    %v1908 = vsub.s32 3, %v1907
    %v1909 = vrot.slane %v26, %v1908
    %v1910 = vadd.f32 %v1904, %v1909
    %v1911 = vadd.f32 %v1905, %v1909
    %v1912 = vsel %vm27, %v1910, 0.0
    %1913 = vadd.xlane.f32.xlu0 %v1912
    %v1914 = vpop.xlane.xlu0 %1913
    %v1915 = vsel %vm27, %v1911, 0.0
    %1916 = vadd.xlane.f32.xlu0 %v1915
    %v1917 = vpop.xlane.xlu0 %1916
    %v1918 = vmul.f32 %v1914, %v34
    %v1919 = vmul.f32 %v1917, %v34
    %v1920 = vsub.f32 %v1910, %v1918
    %v1921 = vsub.f32 %v1911, %v1919
    %v1922 = vmul.f32 %v1920, %v1920
    %v1923 = vmul.f32 %v1921, %v1921
    %v1924 = vsel %vm27, %v1922, 0.0
    %1925 = vadd.xlane.f32.xlu0 %v1924
    %v1926 = vpop.xlane.xlu0 %1925
    %v1927 = vsel %vm27, %v1923, 0.0
    %1928 = vadd.xlane.f32.xlu0 %v1927
    %v1929 = vpop.xlane.xlu0 %1928
    %v1930 = vmul.f32 %v1926, %v34
    %v1931 = vmul.f32 %v1929, %v34
    %v1932 = vadd.f32 %v1930, 1e-05
    %v1933 = vadd.f32 %v1931, 1e-05
    %v1934 = vrsqrt.pop %v1932
    %v1935 = vrsqrt.pop %v1933
    %v1936 = vmul.f32 %v1920, %v1934
    %v1937 = vmul.f32 %v1921, %v1935
    %v1938 = vlaneseq
    %v1939 = vshrl.u32 %v1938, 7
    %v1940 = vsub.s32 4, %v1939
    %v1941 = vrot.slane %v26, %v1940
    %v1942 = vmul.f32 %v1936, %v1941
    %v1943 = vmul.f32 %v1937, %v1941
    %v1944 = vlaneseq
    %v1945 = vshrl.u32 %v1944, 7
    %v1946 = vsub.s32 5, %v1945
    %v1947 = vrot.slane %v26, %v1946
    %v1948 = vadd.f32 %v1942, %v1947
    %v1949 = vadd.f32 %v1943, %v1947
    %v1950 = vld [vmem:[%s4] sm:$0xff]
    %v1951 = vld [vmem:[%s4 + $0x8] sm:$0xff]
    %v1952 = vld [vmem:[%s4 + $0x10] sm:$0xff]
    %v1953 = vld [vmem:[%s4 + $0x18] sm:$0xff]
    %v1954 = vlaneseq
    %v1955 = vshrl.u32 %v1954, 7
    %v1956 = vsub.s32 6, %v1955
    %v1957 = vrot.slane %v26, %v1956
    %v1959 = vsel %vm27, %v1948, 0
    %v1962 = vsel %vm27, %v1949, 0
    %1964 = vmatprep.subr.mxu0 0.0
    %1965 = vmatpush1.msra.mxu0 %v1950
    %1966 = vmatprep.subr.mxu0 0.0
    %1967 = vmatpush1.msra.mxu0 %v1951
    %1968 = vmatprep.subr.mxu0 0.0
    %1969 = vmatpush1.msra.mxu0 %v1952
    %1970 = vmatprep.subr.mxu0 0.0
    %1971 = vmatpush1.msra.mxu0 %v1953
    %1972 = vmatprep.subr.mxu0 0.0
    %1973 = vmatpush1.msra.mxu0 0.0
    %1974 = vmatprep.subr.mxu0 0.0
    %1975 = vmatpush1.msra.mxu0 0.0
    %1976 = vmatprep.subr.mxu0 0.0
    %1977 = vmatpush1.msra.mxu0 0.0
    %1978 = vmatprep.subr.mxu0 0.0
    %1979 = vmatpush1.msra.mxu0 0.0
    %1980 = vmatprep.subr.mxu0 0.0
    %1981 = vmatpush1.msra.mxu0 0.0
    %1982 = vmatprep.subr.mxu0 0.0
    %1983 = vmatpush1.msra.mxu0 0.0
    %1984 = vmatprep.subr.mxu0 0.0
    %1985 = vmatpush1.msra.mxu0 0.0
    %1986 = vmatprep.subr.mxu0 0.0
    %1987 = vmatpush1.msra.mxu0 0.0
    %1988 = vmatprep.subr.mxu0 0.0
    %1989 = vmatpush1.msra.mxu0 0.0
    %1990 = vmatprep.subr.mxu0 0.0
    %1991 = vmatpush1.msra.mxu0 0.0
    %1992 = vmatprep.subr.mxu0 0.0
    %1993 = vmatpush1.msra.mxu0 0.0
    %1994 = vmatprep.subr.mxu0 0.0
    %1995 = vmatpush1.msra.mxu0 0.0
    %1996 = vmatprep.subr.mxu0 0.0
    %1997 = vmatpush1.msra.mxu0 0.0
    %1998 = vmatprep.subr.mxu0 0.0
    %1999 = vmatpush1.msra.mxu0 0.0
    %2000 = vmatprep.subr.mxu0 0.0
    %2001 = vmatpush1.msra.mxu0 0.0
    %2002 = vmatprep.subr.mxu0 0.0
    %2003 = vmatpush1.msra.mxu0 0.0
    %2004 = vmatprep.subr.mxu0 0.0
    %2005 = vmatpush1.msra.mxu0 0.0
    %2006 = vmatprep.subr.mxu0 0.0
    %2007 = vmatpush1.msra.mxu0 0.0
    %2008 = vmatprep.subr.mxu0 0.0
    %2009 = vmatpush1.msra.mxu0 0.0
    %2010 = vmatprep.subr.mxu0 0.0
    %2011 = vmatpush1.msra.mxu0 0.0
    %2012 = vmatprep.subr.mxu0 0.0
    %2013 = vmatpush1.msra.mxu0 0.0
    %2014 = vmatprep.subr.mxu0 0.0
    %2015 = vmatpush1.msra.mxu0 0.0
    %2016 = vmatprep.subr.mxu0 0.0
    %2017 = vmatpush1.msra.mxu0 0.0
    %2018 = vmatprep.subr.mxu0 0.0
    %2019 = vmatpush1.msra.mxu0 0.0
    %2020 = vmatprep.subr.mxu0 0.0
    %2021 = vmatpush1.msra.mxu0 0.0
    %2022 = vmatprep.subr.mxu0 0.0
    %2023 = vmatpush1.msra.mxu0 0.0
    %2024 = vmatprep.subr.mxu0 0.0
    %2025 = vmatpush1.msra.mxu0 0.0
    %2026 = vmatprep.subr.mxu0 0.0
    %2027 = vmatpush1.msra.mxu0 0.0
    %2028 = vmatprep.mubr.f32.mxu0 0.0
    %2029 = vmatmul.mubr.f32.gmra.mrb[0].mxu0 %v1959
    %v2030 = vpop.f32.mrb[0].mxu0
    %v2031 = vadd.f32 %v1957, %v2030
    %v2032 = vpop.f32.mrb[0].mxu0
    %2033 = vmatprep.mubr.f32.mxu0 0.0
    %2034 = vmatmul.mubr.f32.gmra.mrb[0].mxu0 %v1962
    %v2035 = vpop.f32.mrb[0].mxu0
    %v2036 = vadd.f32 %v1957, %v2035
    %v2037 = vpop.f32.mrb[0].mxu0
    %2038 = vdwg.mxu0
    %v2039 = vmul.f32 %v2031, 0.5
    %v2040 = vmul.f32 %v2036, 0.5
    %v2041 = vmul.f32 %v2031, 0.044715
    %v2042 = vmul.f32 %v2036, 0.044715
    %v2043 = vmul.f32 %v2041, %v2031
    %v2044 = vmul.f32 %v2042, %v2036
    %v2045 = vmul.f32 %v2043, %v2031
    %v2046 = vmul.f32 %v2044, %v2036
    %v2047 = vadd.f32 %v2031, %v2045
    %v2048 = vadd.f32 %v2036, %v2046
    %v2049 = vmul.f32 %v2047, 0.7978846
    %v2050 = vmul.f32 %v2048, 0.7978846
    %v2051 = vtanh.pop %v2049
    %v2052 = vtanh.pop %v2050
    %v2053 = vadd.f32 %v2051, 1.0
    %v2054 = vadd.f32 %v2052, 1.0
    %v2055 = vmul.f32 %v2039, %v2053
    %v2056 = vmul.f32 %v2040, %v2054
    %v2057 = vld [vmem:[%s5] sm:$0xff]
    %v2058 = vld [vmem:[%s5 + $0x8] sm:$0xff]
    %v2059 = vld [vmem:[%s5 + $0x10] sm:$0xff]
    %v2060 = vld [vmem:[%s5 + $0x18] sm:$0xff]
    %v2061 = vld [vmem:[%s5 + $0x20] sm:$0xff]
    %v2062 = vld [vmem:[%s5 + $0x28] sm:$0xff]
    %v2063 = vld [vmem:[%s5 + $0x30] sm:$0xff]
    %v2064 = vld [vmem:[%s5 + $0x38] sm:$0xff]
    %v2065 = vld [vmem:[%s5 + $0x40] sm:$0xff]
    %v2066 = vld [vmem:[%s5 + $0x48] sm:$0xff]
    %v2067 = vld [vmem:[%s5 + $0x50] sm:$0xff]
    %v2068 = vld [vmem:[%s5 + $0x58] sm:$0xff]
    %v2069 = vld [vmem:[%s5 + $0x60] sm:$0xff]
    %v2070 = vld [vmem:[%s5 + $0x68] sm:$0xff]
    %v2071 = vld [vmem:[%s5 + $0x70] sm:$0xff]
    %v2072 = vld [vmem:[%s5 + $0x78] sm:$0xff]
    %v2073 = vlaneseq
    %v2074 = vshrl.u32 %v2073, 7
    %v2075 = vsub.s32 7, %v2074
    %v2076 = vrot.slane %v26, %v2075
    %2077 = vmatprep.subr.mxu0 0.0
    %2078 = vmatpush1.msra.mxu0 %v2057
    %2079 = vmatprep.subr.mxu0 0.0
    %2080 = vmatpush1.msra.mxu0 %v2058
    %2081 = vmatprep.subr.mxu0 0.0
    %2082 = vmatpush1.msra.mxu0 %v2059
    %2083 = vmatprep.subr.mxu0 0.0
    %2084 = vmatpush1.msra.mxu0 %v2060
    %2085 = vmatprep.subr.mxu0 0.0
    %2086 = vmatpush1.msra.mxu0 %v2061
    %2087 = vmatprep.subr.mxu0 0.0
    %2088 = vmatpush1.msra.mxu0 %v2062
    %2089 = vmatprep.subr.mxu0 0.0
    %2090 = vmatpush1.msra.mxu0 %v2063
    %2091 = vmatprep.subr.mxu0 0.0
    %2092 = vmatpush1.msra.mxu0 %v2064
    %2093 = vmatprep.subr.mxu0 0.0
    %2094 = vmatpush1.msra.mxu0 %v2065
    %2095 = vmatprep.subr.mxu0 0.0
    %2096 = vmatpush1.msra.mxu0 %v2066
    %2097 = vmatprep.subr.mxu0 0.0
    %2098 = vmatpush1.msra.mxu0 %v2067
    %2099 = vmatprep.subr.mxu0 0.0
    %2100 = vmatpush1.msra.mxu0 %v2068
    %2101 = vmatprep.subr.mxu0 0.0
    %2102 = vmatpush1.msra.mxu0 %v2069
    %2103 = vmatprep.subr.mxu0 0.0
    %2104 = vmatpush1.msra.mxu0 %v2070
    %2105 = vmatprep.subr.mxu0 0.0
    %2106 = vmatpush1.msra.mxu0 %v2071
    %2107 = vmatprep.subr.mxu0 0.0
    %2108 = vmatpush1.msra.mxu0 %v2072
    %2109 = vmatprep.subr.mxu0 0.0
    %2110 = vmatpush1.msra.mxu0 0.0
    %2111 = vmatprep.subr.mxu0 0.0
    %2112 = vmatpush1.msra.mxu0 0.0
    %2113 = vmatprep.subr.mxu0 0.0
    %2114 = vmatpush1.msra.mxu0 0.0
    %2115 = vmatprep.subr.mxu0 0.0
    %2116 = vmatpush1.msra.mxu0 0.0
    %2117 = vmatprep.subr.mxu0 0.0
    %2118 = vmatpush1.msra.mxu0 0.0
    %2119 = vmatprep.subr.mxu0 0.0
    %2120 = vmatpush1.msra.mxu0 0.0
    %2121 = vmatprep.subr.mxu0 0.0
    %2122 = vmatpush1.msra.mxu0 0.0
    %2123 = vmatprep.subr.mxu0 0.0
    %2124 = vmatpush1.msra.mxu0 0.0
    %2125 = vmatprep.subr.mxu0 0.0
    %2126 = vmatpush1.msra.mxu0 0.0
    %2127 = vmatprep.subr.mxu0 0.0
    %2128 = vmatpush1.msra.mxu0 0.0
    %2129 = vmatprep.subr.mxu0 0.0
    %2130 = vmatpush1.msra.mxu0 0.0
    %2131 = vmatprep.subr.mxu0 0.0
    %2132 = vmatpush1.msra.mxu0 0.0
    %2133 = vmatprep.subr.mxu0 0.0
    %2134 = vmatpush1.msra.mxu0 0.0
    %2135 = vmatprep.subr.mxu0 0.0
    %2136 = vmatpush1.msra.mxu0 0.0
    %2137 = vmatprep.subr.mxu0 0.0
    %2138 = vmatpush1.msra.mxu0 0.0
    %2139 = vmatprep.subr.mxu0 0.0
    %2140 = vmatpush1.msra.mxu0 0.0
    %2141 = vmatprep.mubr.f32.mxu0 0.0
    %2142 = vmatmul.mubr.f32.gmra.mrb[0].mxu0 %v2055
    %v2143 = vpop.f32.mrb[0].mxu0
    %v2144 = vadd.f32 %v2076, %v2143
    %v2145 = vpop.f32.mrb[0].mxu0
    %2146 = vmatprep.mubr.f32.mxu0 0.0
    %2147 = vmatmul.mubr.f32.gmra.mrb[0].mxu0 %v2056
    %v2148 = vpop.f32.mrb[0].mxu0
    %v2149 = vadd.f32 %v2076, %v2148
    %v2150 = vpop.f32.mrb[0].mxu0
    %2151 = vdwg.mxu0
    %v2152 = vadd.f32 %v1910, %v2144
    %v2153 = vadd.f32 %v1911, %v2149
    %2154 = vst.msk [vmem:[#allocation5] sm:$0xff] %vm27, %v2152
    %2155 = vst.msk [vmem:[#allocation5 + $0x8] sm:$0xff] %vm27, %v2153
    // Predicated region
    $region26: #{tpu_custom_call.1} parent=1 // pred_check
      _
    $region27: #{tpu_custom_call.1} parent=1 // pred_check_branch
      %2157 = sbr.rel (0) target = $region29
    $region28: #{tpu_custom_call.1} parent=1 // pred_region
      %s2159 = ssub.s32 256, 256
      %2160 = vsyncadd [#allocation6], %s2159
      %s2161 = sshll.u32 [#allocation5], 4
      %s2162 = int_to_ptr.vmem [resolvable:$true] %s2161
      %2167 = dma.vmem_to_hbm [thread:$0]  %s2162, 256, %s6, [#allocation6], 128, 128, 8
    $region29: #{tpu_custom_call.1} parent=1 // pred_fallthru
      _
    // Predicated region
    $region30: #{tpu_custom_call.1} parent=1 // pred_check
      _
    $region31: #{tpu_custom_call.1} parent=1 // pred_check_branch
      %2169 = sbr.rel (0) target = $region33
    $region32: #{tpu_custom_call.1} parent=1 // pred_region
      %2170 = dma.done [#allocation6], 256
    $region33: #{tpu_custom_call.1} parent=1 // pred_fallthru
      _
    %2171 = vsyncpa [#allocation6], 1

</llo_original>
